<compile_context>
chip_gen: v5e
topology: v5e:2x2
jax: 0.10.0
libtpu: 0.0.40
codegen_flags: <defaults>
</compile_context>

<pallas_src>
import functools
import math

import jax
import jax.numpy as jnp
from jax.experimental import pallas as pl
from jax.experimental.pallas import tpu as pltpu


_SQRT_HALF = 0.7071067811865476


def _gelu_erf(u, *, approx=True):
    """Exact (erf-based) GELU matching torch.nn.functional.gelu's default.

    erf is approximated with A&S 7.1.26 (|err| < 1.5e-7).  The 1/(1+p|z|)
    reciprocal goes to the EUP slot when approx=True (frees a VALU op per
    element on the largest activation of the kernel).
    """
    z = u * _SQRT_HALF
    a1, a2, a3, a4, a5 = 0.254829592, -0.284496736, 1.421413741, -1.453152027, 1.061405429
    pc = 0.3275911
    az = jnp.abs(z)
    t = pl.reciprocal(1.0 + pc * az, approx=approx)
    poly = ((((a5 * t + a4) * t + a3) * t + a2) * t + a1) * t
    erf_abs = 1.0 - poly * jnp.exp(-az * az)
    erf_z = jnp.where(z >= 0, erf_abs, -erf_abs)
    return 0.5 * u * (1.0 + erf_z)


def _transformer_block_kernel(x_ref, anw_ref, wqkv_ref, wo_ref, fnw_ref,
                              w1_ref, b1_ref, w2_ref, b2_ref, o_ref, h_scratch,
                              *, eps, matmul_dtype, approx_math):
    """One grid step == one tile of TB batch elements.

    x_ref    : [TB, S, D]
    anw/fnw  : [1, D]   f32 RMSNorm weights
    wqkv_ref : [D, 3D]  fused, pre-transposed Q|K|V projection (scale folded
                        into the Q columns), bf16 on the perf path
    wo_ref   : [D, D];  w1 [D, H], b1 [1, H] f32; w2 [H, D], b2 [1, D] f32
    o_ref    : [TB, S, D]
    h_scratch: VMEM [TB*S, D] f32 — residual parked here across the FFN
    """
    TB, S, D = x_ref.shape
    md = matmul_dtype
    M = TB * S

    # Fold batch into the matmul M dimension (layout-trivial leading-dim merge).
    x = x_ref[...].astype(jnp.float32).reshape(M, D)

    # ---- attention_norm (RMSNorm, f32) ------------------------------------
    anw = anw_ref[...]
    xn = x * jax.lax.rsqrt(jnp.mean(x * x, axis=-1, keepdims=True) + eps) * anw

    # ---- fused QKV projection on the whole [TB*S, D] slab ------------------
    qkv = jnp.dot(xn.astype(md), wqkv_ref[...].astype(md),
                  preferred_element_type=jnp.float32)                      # [M, 3D] f32
    qkv_md = qkv.astype(md)             # single cast of the slab for the MXU
    q = qkv_md[:, :D].reshape(TB, S, D)          # 1/sqrt(dim) already in Wq
    k = qkv_md[:, D:2 * D].reshape(TB, S, D)
    v = qkv_md[:, 2 * D:].reshape(TB, S, D)

    # ---- scores / softmax (contract last dims; no explicit k transpose) ----
    scores = jnp.einsum("bqd,bkd->bqk", q, k,
                        preferred_element_type=jnp.float32)                # [TB, S, S]
    m = jnp.max(scores, axis=-1, keepdims=True)
    p = jnp.exp(scores - m)
    denom = jnp.sum(p, axis=-1, keepdims=True)
    if approx_math:
        attn = p * pl.reciprocal(denom, approx=True)        # EUP slot
    else:
        attn = p / denom                                      # exact parity

    ctx = jnp.einsum("bqk,bkd->bqd", attn.astype(md), v,
                     preferred_element_type=jnp.float32)                   # [TB, S, D]
    attn_out = jnp.dot(ctx.reshape(M, D).astype(md), wo_ref[...].astype(md),
                       preferred_element_type=jnp.float32)                 # [M, D]

    h = x + attn_out                                                       # residual 1
    h_scratch[...] = h        # bound the residual's live range across the FFN

    # ---- ffn_norm + FeedForward (Linear -> GELU -> Linear, with biases) ----
    fnw = fnw_ref[...]
    hn = h * jax.lax.rsqrt(jnp.mean(h * h, axis=-1, keepdims=True) + eps) * fnw
    u = jnp.dot(hn.astype(md), w1_ref[...].astype(md),
                preferred_element_type=jnp.float32) + b1_ref[...]
    g = _gelu_erf(u, approx=approx_math)
    f = jnp.dot(g.astype(md), w2_ref[...].astype(md),
                preferred_element_type=jnp.float32) + b2_ref[...]

    o_ref[...] = (h_scratch[...] + f).reshape(TB, S, D).astype(o_ref.dtype)  # residual 2


def prepare_block_params(p, *, weight_dtype=jnp.bfloat16):
    """Torch-style params -> kernel-ready layout.  Done ONCE at weight-load time.

    * pre-transpose [out, in] -> [in, out]
    * fuse Wq|Wk|Wv into one [D, 3D] matmul, with 1/sqrt(dim) folded into Wq
    * cast matmul weights to `weight_dtype` (bf16 by default -> half the DMA
      bytes / VMEM residency, native MXU dtype); norm weights & biases stay f32
    """
    dim = p["wq"].shape[1]
    scale = 1.0 / math.sqrt(dim)
    wqkv = jnp.concatenate([(p["wq"] * scale).T, p["wk"].T, p["wv"].T], axis=1)
    return dict(
        attn_norm_w=p["attn_norm_w"].reshape(1, -1).astype(jnp.float32),
        wqkv=wqkv.astype(weight_dtype),
        wo=p["wo"].T.astype(weight_dtype),
        ffn_norm_w=p["ffn_norm_w"].reshape(1, -1).astype(jnp.float32),
        w1=p["w1"].T.astype(weight_dtype),
        b1=p["b1"].reshape(1, -1).astype(jnp.float32),
        w2=p["w2"].T.astype(weight_dtype),
        b2=p["b2"].reshape(1, -1).astype(jnp.float32),
    )


def _weight_bytes(D, H, w_itemsize=2):
    return w_itemsize * (3 * D * D + D * D + 2 * D * H) + 4 * (3 * D + H)


def _act_bytes(TB, S, D, H, x_itemsize):
    M = TB * S
    return (2 * 2 * x_itemsize * M * D      # double-buffered x & o tiles
            + 4 * M * 3 * D                 # qkv (f32)
            + 2 * 4 * TB * S * S            # scores + p (f32)
            + 2 * 4 * M * H                 # u, g (f32)
            + 6 * 4 * M * D)                # xn, h, hn, ctx, attn_out, f (f32)


def _choose_block_batch(B, S, D, H, x_itemsize, budget_bytes=48 * 2**20):
    """Largest TB dividing B with grid >= 2 steps (when B > 1) that fits budget.

    budget defaults to ~48 MiB so the same choice is safe on v7x (64 MiB VMEM)
    as well as v5e/v6e (128 MiB).
    """
    best = 1
    for tb in range(1, B + 1):
        if B % tb:
            continue
        if B > 1 and B // tb < 2:
            continue  # keep >= 2 parallel tiles: both v7x TCs busy, DMA overlapped
        if _weight_bytes(D, H) + _act_bytes(tb, S, D, H, x_itemsize) <= budget_bytes:
            best = tb
    return best


def _vmem_limit_bytes(TB, S, D, H, x_itemsize):
    need = _weight_bytes(D, H) + _act_bytes(TB, S, D, H, x_itemsize)
    # floor at the default 32 MiB, cap at v7x's 64 MiB physical VMEM
    return int(min(64 * 2**20, max(32 * 2**20, 2 * need)))


def transformer_block_forward(x, kp, *, eps=1e-6, block_batch=None,
                              matmul_dtype=jnp.bfloat16, approx_math=True,
                              single_buffer_weights=True):
    """x: [B, S, D]; kp: output of prepare_block_params.

    matmul_dtype=bf16 + approx_math=True is the performance path; pass
    matmul_dtype=jnp.float32, approx_math=False (with f32-prepared weights)
    for exact parity with the PyTorch reference.
    """
    B, S, D = x.shape
    H = kp["w1"].shape[1]
    x_itemsize = jnp.dtype(x.dtype).itemsize

    TB = (_choose_block_batch(B, S, D, H, x_itemsize)
          if block_batch is None else block_batch)
    assert B % TB == 0
    vmem_limit = _vmem_limit_bytes(TB, S, D, H, x_itemsize)

    kernel = functools.partial(
        _transformer_block_kernel,
        eps=eps, matmul_dtype=matmul_dtype, approx_math=approx_math)

    def _const_spec(shape, buffer_count):
        # Constant-index weight/bias block; single-buffer when supported.
        if buffer_count is None:
            return pl.BlockSpec(shape, lambda b: (0, 0))
        return pl.BlockSpec(shape, lambda b: (0, 0),
                            pipeline_mode=pl.Buffered(buffer_count))

    def _run(weight_buffer_count):
        grid_spec = pltpu.PrefetchScalarGridSpec(
            num_scalar_prefetch=0,
            grid=(B // TB,),
            in_specs=[
                pl.BlockSpec((TB, S, D), lambda b: (b, 0, 0)),            # x tile
                _const_spec((1, D), weight_buffer_count),                 # attn_norm w
                _const_spec((D, 3 * D), weight_buffer_count),             # fused Wqkv
                _const_spec((D, D), weight_buffer_count),                 # Wo
                _const_spec((1, D), weight_buffer_count),                 # ffn_norm w
                _const_spec((D, H), weight_buffer_count),                 # W1
                _const_spec((1, H), weight_buffer_count),                 # b1
                _const_spec((H, D), weight_buffer_count),                 # W2
                _const_spec((1, D), weight_buffer_count),                 # b2
            ],
            out_specs=pl.BlockSpec((TB, S, D), lambda b: (b, 0, 0)),
            scratch_shapes=[pltpu.VMEM((TB * S, D), jnp.float32)],        # residual h
        )
        return pl.pallas_call(
            kernel,
            out_shape=jax.ShapeDtypeStruct((B, S, D), x.dtype),
            grid_spec=grid_spec,
            compiler_params=pltpu.CompilerParams(
                dimension_semantics=("parallel",),   # batch tiles shard across TCs
                vmem_limit_bytes=vmem_limit),
        )(x, kp["attn_norm_w"], kp["wqkv"], kp["wo"], kp["ffn_norm_w"],
          kp["w1"], kp["b1"], kp["w2"], kp["b2"])

    if single_buffer_weights:
        try:
            return _run(1)
        except Exception:
            # Fallback if this jax/Mosaic build rejects pipeline_mode=Buffered(1);
            # default double-buffering is still correct, just 2x weight VMEM.
            pass
    return _run(None)


def transformer_block_reference(x, p, *, dim, eps=1e-6):
    """Pure-JAX reference mirroring the PyTorch TransformerBlock exactly."""
    def rmsnorm(y, w):
        return y * jax.lax.rsqrt(jnp.mean(y * y, axis=-1, keepdims=True) + eps) * w

    def attention(y):
        q = y @ p["wq"].T
        k = y @ p["wk"].T
        v = y @ p["wv"].T
        scores = (q @ jnp.swapaxes(k, -2, -1)) / (dim ** 0.5)
        attn = jax.nn.softmax(scores, axis=-1)
        return (attn @ v) @ p["wo"].T

    h = x + attention(rmsnorm(x, p["attn_norm_w"]))
    hn = rmsnorm(h, p["ffn_norm_w"])
    u = hn @ p["w1"].T + p["b1"]
    g = 0.5 * u * (1.0 + jax.scipy.special.erf(u * _SQRT_HALF))   # exact GELU (F.gelu default)
    return h + (g @ p["w2"].T + p["b2"])


if __name__ == "__main__":
    # ModelArgs-like settings: dim=32, n_heads=4 => head_dim=8, n_heads*head_dim=dim,
    # so the attention Linears are all [dim, dim]; FeedForward hidden = 4*dim = 128.
    dim = 32
    n_heads = 4
    hidden = 4 * dim
    batch = 2
    seq = 8

    key = jax.random.PRNGKey(0)
    keys = jax.random.split(key, 11)
    s = 1.0 / math.sqrt(dim)
    sh = 1.0 / math.sqrt(hidden)

    x = jax.random.normal(keys[0], (batch, seq, dim), dtype=jnp.float32)

    # Deterministic synthetic parameters (torch nn.Linear stores [out, in]).
    torch_params = dict(
        wq=jax.random.uniform(keys[1], (dim, dim), jnp.float32, -s, s),
        wk=jax.random.uniform(keys[2], (dim, dim), jnp.float32, -s, s),
        wv=jax.random.uniform(keys[3], (dim, dim), jnp.float32, -s, s),
        wo=jax.random.uniform(keys[4], (dim, dim), jnp.float32, -s, s),
        attn_norm_w=jax.random.uniform(keys[5], (dim,), jnp.float32, 0.5, 1.5),
        ffn_norm_w=jax.random.uniform(keys[6], (dim,), jnp.float32, 0.5, 1.5),
        w1=jax.random.uniform(keys[7], (hidden, dim), jnp.float32, -s, s),
        b1=jax.random.uniform(keys[8], (hidden,), jnp.float32, -s, s),
        w2=jax.random.uniform(keys[9], (dim, hidden), jnp.float32, -sh, sh),
        b2=jax.random.uniform(keys[10], (dim,), jnp.float32, -sh, sh),
    )

    ref = transformer_block_reference(x, torch_params, dim=dim)

    # Default performance path: bf16 weights + bf16 MXU (f32 accumulation),
    # approx EUP reciprocals, 2 parallel batch tiles.  Loose tolerance (bf16).
    kp_bf16 = prepare_block_params(torch_params)                   # bf16 weights
    out = jax.block_until_ready(transformer_block_forward(x, kp_bf16))
    assert out.shape == (batch, seq, dim)
    err = float(jnp.max(jnp.abs(out - ref)))
    assert jnp.allclose(out, ref, atol=0.25, rtol=0.25), \
        f"bf16 path mismatch, max abs err {err}"

    # Exact-parity path: f32 weights, f32 MXU, exact softmax divide / GELU
    # reciprocal (addresses the approx-reciprocal correctness concern).
    kp_f32 = prepare_block_params(torch_params, weight_dtype=jnp.float32)
    out32 = jax.block_until_ready(transformer_block_forward(
        x, kp_f32, matmul_dtype=jnp.float32, approx_math=False))
    err32 = float(jnp.max(jnp.abs(out32 - ref)))
    assert jnp.allclose(out32, ref, atol=2e-3, rtol=2e-3), \
        f"f32 mismatch, max abs err {err32}"

    print("KERNEL_OK")
</pallas_src>

<mosaic_0001>
module attributes {stable_mosaic.version = 11 : i64} {
  func.func @_transformer_block_kernel(%arg0: i32, %arg1: memref<1x8x32xf32, #tpu.memory_space<vmem>>, %arg2: memref<1x32xf32, #tpu.memory_space<vmem>>, %arg3: memref<32x96xbf16, #tpu.memory_space<vmem>>, %arg4: memref<32x32xbf16, #tpu.memory_space<vmem>>, %arg5: memref<1x32xf32, #tpu.memory_space<vmem>>, %arg6: memref<32x128xbf16, #tpu.memory_space<vmem>>, %arg7: memref<1x128xf32, #tpu.memory_space<vmem>>, %arg8: memref<128x32xbf16, #tpu.memory_space<vmem>>, %arg9: memref<1x32xf32, #tpu.memory_space<vmem>>, %arg10: memref<1x8x32xf32, #tpu.memory_space<vmem>>, %arg11: memref<8x32xf32, #tpu.memory_space<vmem>>) attributes {dimension_semantics = [#tpu.dimension_semantics<parallel>], iteration_bounds = array<i64: 2>, scalar_prefetch = 0 : i64, scratch_operands = 1 : i64, tpu.core_type = #tpu.core_type<tc>, window_params = [{transform_indices = @transform_0, window_bounds = array<i64: 1, 8, 32>}, {pipeline_mode = #tpu.pipeline_mode<synchronous>, transform_indices = @transform_1, window_bounds = array<i64: 1, 32>}, {pipeline_mode = #tpu.pipeline_mode<synchronous>, transform_indices = @transform_2, window_bounds = array<i64: 32, 96>}, {pipeline_mode = #tpu.pipeline_mode<synchronous>, transform_indices = @transform_3, window_bounds = array<i64: 32, 32>}, {pipeline_mode = #tpu.pipeline_mode<synchronous>, transform_indices = @transform_4, window_bounds = array<i64: 1, 32>}, {pipeline_mode = #tpu.pipeline_mode<synchronous>, transform_indices = @transform_5, window_bounds = array<i64: 32, 128>}, {pipeline_mode = #tpu.pipeline_mode<synchronous>, transform_indices = @transform_6, window_bounds = array<i64: 1, 128>}, {pipeline_mode = #tpu.pipeline_mode<synchronous>, transform_indices = @transform_7, window_bounds = array<i64: 128, 32>}, {pipeline_mode = #tpu.pipeline_mode<synchronous>, transform_indices = @transform_8, window_bounds = array<i64: 1, 32>}, {transform_indices = @transform_9, window_bounds = array<i64: 1, 8, 32>}]} {
    %c0 = arith.constant 0 : index
    %c0_0 = arith.constant 0 : index
    %c0_1 = arith.constant 0 : index
    %0 = vector.load %arg1[%c0, %c0_0, %c0_1] : memref<1x8x32xf32, #tpu.memory_space<vmem>>, vector<1x8x32xf32>
    %1 = vector.shape_cast %0 : vector<1x8x32xf32> to vector<8x32xf32>
    %c0_2 = arith.constant 0 : index
    %c0_3 = arith.constant 0 : index
    %2 = vector.load %arg2[%c0_2, %c0_3] : memref<1x32xf32, #tpu.memory_space<vmem>>, vector<1x32xf32>
    %3 = arith.mulf %1, %1 : vector<8x32xf32>
    %cst = arith.constant dense<0.000000e+00> : vector<8xf32>
    %4 = vector.multi_reduction <add>, %3, %cst [1] : vector<8x32xf32> to vector<8xf32>
    %5 = vector.shape_cast %4 : vector<8xf32> to vector<8x1xf32>
    %cst_4 = arith.constant 3.200000e+01 : f32
    %6 = vector.broadcast %cst_4 : f32 to vector<8x1xf32>
    %7 = arith.divf %5, %6 : vector<8x1xf32>
    %cst_5 = arith.constant 9.99999997E-7 : f32
    %8 = vector.broadcast %cst_5 : f32 to vector<8x1xf32>
    %9 = arith.addf %7, %8 : vector<8x1xf32>
    %10 = math.rsqrt %9 : vector<8x1xf32>
    %11 = vector.broadcast %10 : vector<8x1xf32> to vector<8x32xf32>
    %12 = arith.mulf %1, %11 : vector<8x32xf32>
    %13 = vector.broadcast %2 : vector<1x32xf32> to vector<8x32xf32>
    %14 = arith.mulf %12, %13 : vector<8x32xf32>
    %15 = arith.truncf %14 : vector<8x32xf32> to vector<8x32xbf16>
    %c0_6 = arith.constant 0 : index
    %c0_7 = arith.constant 0 : index
    %16 = vector.load %arg3[%c0_6, %c0_7] : memref<32x96xbf16, #tpu.memory_space<vmem>>, vector<32x96xbf16>
    %cst_8 = arith.constant dense<0.000000e+00> : vector<8x96xf32>
    %17 = tpu.matmul %15, %16, %cst_8 {dimension_numbers = #tpu.dot_dimension_numbers<[1], [0], [0], [1], [0, 0, 1, 1], [], []>} : vector<8x32xbf16>, vector<32x96xbf16>, vector<8x96xf32> -> vector<8x96xf32>
    %18 = arith.truncf %17 : vector<8x96xf32> to vector<8x96xbf16>
    %19 = vector.extract_strided_slice %18 {offsets = [0, 0], sizes = [8, 32], strides = [1, 1]} : vector<8x96xbf16> to vector<8x32xbf16>
    %20 = vector.shape_cast %19 : vector<8x32xbf16> to vector<1x8x32xbf16>
    %21 = vector.extract_strided_slice %18 {offsets = [0, 32], sizes = [8, 32], strides = [1, 1]} : vector<8x96xbf16> to vector<8x32xbf16>
    %22 = vector.shape_cast %21 : vector<8x32xbf16> to vector<1x8x32xbf16>
    %23 = vector.extract_strided_slice %18 {offsets = [0, 64], sizes = [8, 32], strides = [1, 1]} : vector<8x96xbf16> to vector<8x32xbf16>
    %24 = vector.shape_cast %23 : vector<8x32xbf16> to vector<1x8x32xbf16>
    "tpu.trace_start"() <{level = 10 : i32, message = "bqd,bkd->bqk"}> : () -> ()
    %cst_9 = arith.constant dense<0.000000e+00> : vector<1x8x8xf32>
    %25 = tpu.matmul %20, %22, %cst_9 {dimension_numbers = #tpu.dot_dimension_numbers<[2], [2], [1], [1], [0, 0, 0, 1, 1, 1], [0], [0]>} : vector<1x8x32xbf16>, vector<1x8x32xbf16>, vector<1x8x8xf32> -> vector<1x8x8xf32>
    "tpu.trace_stop"() : () -> ()
    %cst_10 = arith.constant dense<0xFF800000> : vector<1x8xf32>
    %26 = vector.multi_reduction <maximumf>, %25, %cst_10 [2] : vector<1x8x8xf32> to vector<1x8xf32>
    %27 = vector.shape_cast %26 : vector<1x8xf32> to vector<1x8x1xf32>
    %28 = vector.broadcast %27 : vector<1x8x1xf32> to vector<1x8x8xf32>
    %29 = arith.subf %25, %28 : vector<1x8x8xf32>
    %30 = math.exp %29 : vector<1x8x8xf32>
    %cst_11 = arith.constant dense<0.000000e+00> : vector<1x8xf32>
    %31 = vector.multi_reduction <add>, %30, %cst_11 [2] : vector<1x8x8xf32> to vector<1x8xf32>
    %32 = vector.shape_cast %31 : vector<1x8xf32> to vector<1x8x1xf32>
    %33 = tpu.reciprocal %32 {approx = true} : vector<1x8x1xf32> -> vector<1x8x1xf32>
    %34 = vector.broadcast %33 : vector<1x8x1xf32> to vector<1x8x8xf32>
    %35 = arith.mulf %30, %34 : vector<1x8x8xf32>
    %36 = arith.truncf %35 : vector<1x8x8xf32> to vector<1x8x8xbf16>
    "tpu.trace_start"() <{level = 10 : i32, message = "bqk,bkd->bqd"}> : () -> ()
    %cst_12 = arith.constant dense<0.000000e+00> : vector<1x8x32xf32>
    %37 = tpu.matmul %36, %24, %cst_12 {dimension_numbers = #tpu.dot_dimension_numbers<[2], [1], [1], [2], [0, 0, 0, 1, 1, 2], [0], [0]>} : vector<1x8x8xbf16>, vector<1x8x32xbf16>, vector<1x8x32xf32> -> vector<1x8x32xf32>
    "tpu.trace_stop"() : () -> ()
    %38 = vector.shape_cast %37 : vector<1x8x32xf32> to vector<8x32xf32>
    %39 = arith.truncf %38 : vector<8x32xf32> to vector<8x32xbf16>
    %c0_13 = arith.constant 0 : index
    %c0_14 = arith.constant 0 : index
    %40 = vector.load %arg4[%c0_13, %c0_14] : memref<32x32xbf16, #tpu.memory_space<vmem>>, vector<32x32xbf16>
    %cst_15 = arith.constant dense<0.000000e+00> : vector<8x32xf32>
    %41 = tpu.matmul %39, %40, %cst_15 {dimension_numbers = #tpu.dot_dimension_numbers<[1], [0], [0], [1], [0, 0, 1, 1], [], []>} : vector<8x32xbf16>, vector<32x32xbf16>, vector<8x32xf32> -> vector<8x32xf32>
    %42 = arith.addf %1, %41 : vector<8x32xf32>
    %c0_16 = arith.constant 0 : index
    %c0_17 = arith.constant 0 : index
    %43 = vector.load %arg11[%c0_16, %c0_17] : memref<8x32xf32, #tpu.memory_space<vmem>>, vector<8x32xf32>
    tpu.vector_store %arg11[%c0_16, %c0_17], %42 {strides = array<i32>} : memref<8x32xf32, #tpu.memory_space<vmem>>, vector<8x32xf32>,
    %c0_18 = arith.constant 0 : index
    %c0_19 = arith.constant 0 : index
    %44 = vector.load %arg5[%c0_18, %c0_19] : memref<1x32xf32, #tpu.memory_space<vmem>>, vector<1x32xf32>
    %45 = arith.mulf %42, %42 : vector<8x32xf32>
    %cst_20 = arith.constant dense<0.000000e+00> : vector<8xf32>
    %46 = vector.multi_reduction <add>, %45, %cst_20 [1] : vector<8x32xf32> to vector<8xf32>
    %47 = vector.shape_cast %46 : vector<8xf32> to vector<8x1xf32>
    %cst_21 = arith.constant 3.200000e+01 : f32
    %48 = vector.broadcast %cst_21 : f32 to vector<8x1xf32>
    %49 = arith.divf %47, %48 : vector<8x1xf32>
    %cst_22 = arith.constant 9.99999997E-7 : f32
    %50 = vector.broadcast %cst_22 : f32 to vector<8x1xf32>
    %51 = arith.addf %49, %50 : vector<8x1xf32>
    %52 = math.rsqrt %51 : vector<8x1xf32>
    %53 = vector.broadcast %52 : vector<8x1xf32> to vector<8x32xf32>
    %54 = arith.mulf %42, %53 : vector<8x32xf32>
    %55 = vector.broadcast %44 : vector<1x32xf32> to vector<8x32xf32>
    %56 = arith.mulf %54, %55 : vector<8x32xf32>
    %57 = arith.truncf %56 : vector<8x32xf32> to vector<8x32xbf16>
    %c0_23 = arith.constant 0 : index
    %c0_24 = arith.constant 0 : index
    %58 = vector.load %arg6[%c0_23, %c0_24] : memref<32x128xbf16, #tpu.memory_space<vmem>>, vector<32x128xbf16>
    %cst_25 = arith.constant dense<0.000000e+00> : vector<8x128xf32>
    %59 = tpu.matmul %57, %58, %cst_25 {dimension_numbers = #tpu.dot_dimension_numbers<[1], [0], [0], [1], [0, 0, 1, 1], [], []>} : vector<8x32xbf16>, vector<32x128xbf16>, vector<8x128xf32> -> vector<8x128xf32>
    %c0_26 = arith.constant 0 : index
    %c0_27 = arith.constant 0 : index
    %60 = vector.load %arg7[%c0_26, %c0_27] : memref<1x128xf32, #tpu.memory_space<vmem>>, vector<1x128xf32>
    %61 = vector.broadcast %60 : vector<1x128xf32> to vector<8x128xf32>
    %62 = arith.addf %59, %61 : vector<8x128xf32>
    %cst_28 = arith.constant 0.707106769 : f32
    %63 = vector.broadcast %cst_28 : f32 to vector<8x128xf32>
    %64 = arith.mulf %62, %63 : vector<8x128xf32>
    %65 = math.absf %64 : vector<8x128xf32>
    %cst_29 = arith.constant 0.327591091 : f32
    %66 = vector.broadcast %cst_29 : f32 to vector<8x128xf32>
    %67 = arith.mulf %66, %65 : vector<8x128xf32>
    %cst_30 = arith.constant 1.000000e+00 : f32
    %68 = vector.broadcast %cst_30 : f32 to vector<8x128xf32>
    %69 = arith.addf %68, %67 : vector<8x128xf32>
    %70 = tpu.reciprocal %69 {approx = true} : vector<8x128xf32> -> vector<8x128xf32>
    %cst_31 = arith.constant 1.06140542 : f32
    %71 = vector.broadcast %cst_31 : f32 to vector<8x128xf32>
    %72 = arith.mulf %71, %70 : vector<8x128xf32>
    %cst_32 = arith.constant -1.45315206 : f32
    %73 = vector.broadcast %cst_32 : f32 to vector<8x128xf32>
    %74 = arith.addf %72, %73 : vector<8x128xf32>
    %75 = arith.mulf %74, %70 : vector<8x128xf32>
    %cst_33 = arith.constant 1.42141378 : f32
    %76 = vector.broadcast %cst_33 : f32 to vector<8x128xf32>
    %77 = arith.addf %75, %76 : vector<8x128xf32>
    %78 = arith.mulf %77, %70 : vector<8x128xf32>
    %cst_34 = arith.constant -0.284496725 : f32
    %79 = vector.broadcast %cst_34 : f32 to vector<8x128xf32>
    %80 = arith.addf %78, %79 : vector<8x128xf32>
    %81 = arith.mulf %80, %70 : vector<8x128xf32>
    %cst_35 = arith.constant 0.254829586 : f32
    %82 = vector.broadcast %cst_35 : f32 to vector<8x128xf32>
    %83 = arith.addf %81, %82 : vector<8x128xf32>
    %84 = arith.mulf %83, %70 : vector<8x128xf32>
    %cst_36 = arith.constant 0.000000e+00 : f32
    %85 = vector.broadcast %cst_36 : f32 to vector<8x128xf32>
    %86 = arith.subf %85, %65 : vector<8x128xf32>
    %87 = arith.mulf %86, %65 : vector<8x128xf32>
    %88 = math.exp %87 : vector<8x128xf32>
    %89 = arith.mulf %84, %88 : vector<8x128xf32>
    %cst_37 = arith.constant 1.000000e+00 : f32
    %90 = vector.broadcast %cst_37 : f32 to vector<8x128xf32>
    %91 = arith.subf %90, %89 : vector<8x128xf32>
    %cst_38 = arith.constant 0.000000e+00 : f32
    %92 = vector.broadcast %cst_38 : f32 to vector<8x128xf32>
    %93 = arith.cmpf oge, %64, %92 : vector<8x128xf32>
    %cst_39 = arith.constant 0.000000e+00 : f32
    %94 = vector.broadcast %cst_39 : f32 to vector<8x128xf32>
    %95 = arith.subf %94, %91 : vector<8x128xf32>
    %96 = arith.select %93, %91, %95 : vector<8x128xi1>, vector<8x128xf32>
    %cst_40 = arith.constant 5.000000e-01 : f32
    %97 = vector.broadcast %cst_40 : f32 to vector<8x128xf32>
    %98 = arith.mulf %97, %62 : vector<8x128xf32>
    %cst_41 = arith.constant 1.000000e+00 : f32
    %99 = vector.broadcast %cst_41 : f32 to vector<8x128xf32>
    %100 = arith.addf %99, %96 : vector<8x128xf32>
    %101 = arith.mulf %98, %100 : vector<8x128xf32>
    %102 = arith.truncf %101 : vector<8x128xf32> to vector<8x128xbf16>
    %c0_42 = arith.constant 0 : index
    %c0_43 = arith.constant 0 : index
    %103 = vector.load %arg8[%c0_42, %c0_43] : memref<128x32xbf16, #tpu.memory_space<vmem>>, vector<128x32xbf16>
    %cst_44 = arith.constant dense<0.000000e+00> : vector<8x32xf32>
    %104 = tpu.matmul %102, %103, %cst_44 {dimension_numbers = #tpu.dot_dimension_numbers<[1], [0], [0], [1], [0, 0, 1, 1], [], []>} : vector<8x128xbf16>, vector<128x32xbf16>, vector<8x32xf32> -> vector<8x32xf32>
    %c0_45 = arith.constant 0 : index
    %c0_46 = arith.constant 0 : index
    %105 = vector.load %arg9[%c0_45, %c0_46] : memref<1x32xf32, #tpu.memory_space<vmem>>, vector<1x32xf32>
    %106 = vector.broadcast %105 : vector<1x32xf32> to vector<8x32xf32>
    %107 = arith.addf %104, %106 : vector<8x32xf32>
    %c0_47 = arith.constant 0 : index
    %c0_48 = arith.constant 0 : index
    %108 = vector.load %arg11[%c0_47, %c0_48] : memref<8x32xf32, #tpu.memory_space<vmem>>, vector<8x32xf32>
    %109 = arith.addf %108, %107 : vector<8x32xf32>
    %110 = vector.shape_cast %109 : vector<8x32xf32> to vector<1x8x32xf32>
    %c0_49 = arith.constant 0 : index
    %c0_50 = arith.constant 0 : index
    %c0_51 = arith.constant 0 : index
    %111 = vector.load %arg10[%c0_49, %c0_50, %c0_51] : memref<1x8x32xf32, #tpu.memory_space<vmem>>, vector<1x8x32xf32>
    tpu.vector_store %arg10[%c0_49, %c0_50, %c0_51], %110 {strides = array<i32>} : memref<1x8x32xf32, #tpu.memory_space<vmem>>, vector<1x8x32xf32>,
    return
  }
  func.func @transform_0(%arg0: i32) -> (i32, i32, i32) {
    %c0_i32 = arith.constant 0 : i32
    %c0_i32_0 = arith.constant 0 : i32
    %c0_i32_1 = arith.constant 0 : i32
    return %arg0, %c0_i32, %c0_i32_0 : i32, i32, i32
  }
  func.func @transform_1(%arg0: i32) -> (i32, i32) {
    %c0_i32 = arith.constant 0 : i32
    %c0_i32_0 = arith.constant 0 : i32
    %c0_i32_1 = arith.constant 0 : i32
    return %c0_i32, %c0_i32_0 : i32, i32
  }
  func.func @transform_2(%arg0: i32) -> (i32, i32) {
    %c0_i32 = arith.constant 0 : i32
    %c0_i32_0 = arith.constant 0 : i32
    %c0_i32_1 = arith.constant 0 : i32
    return %c0_i32, %c0_i32_0 : i32, i32
  }
  func.func @transform_3(%arg0: i32) -> (i32, i32) {
    %c0_i32 = arith.constant 0 : i32
    %c0_i32_0 = arith.constant 0 : i32
    %c0_i32_1 = arith.constant 0 : i32
    return %c0_i32, %c0_i32_0 : i32, i32
  }
  func.func @transform_4(%arg0: i32) -> (i32, i32) {
    %c0_i32 = arith.constant 0 : i32
    %c0_i32_0 = arith.constant 0 : i32
    %c0_i32_1 = arith.constant 0 : i32
    return %c0_i32, %c0_i32_0 : i32, i32
  }
  func.func @transform_5(%arg0: i32) -> (i32, i32) {
    %c0_i32 = arith.constant 0 : i32
    %c0_i32_0 = arith.constant 0 : i32
    %c0_i32_1 = arith.constant 0 : i32
    return %c0_i32, %c0_i32_0 : i32, i32
  }
  func.func @transform_6(%arg0: i32) -> (i32, i32) {
    %c0_i32 = arith.constant 0 : i32
    %c0_i32_0 = arith.constant 0 : i32
    %c0_i32_1 = arith.constant 0 : i32
    return %c0_i32, %c0_i32_0 : i32, i32
  }
  func.func @transform_7(%arg0: i32) -> (i32, i32) {
    %c0_i32 = arith.constant 0 : i32
    %c0_i32_0 = arith.constant 0 : i32
    %c0_i32_1 = arith.constant 0 : i32
    return %c0_i32, %c0_i32_0 : i32, i32
  }
  func.func @transform_8(%arg0: i32) -> (i32, i32) {
    %c0_i32 = arith.constant 0 : i32
    %c0_i32_0 = arith.constant 0 : i32
    %c0_i32_1 = arith.constant 0 : i32
    return %c0_i32, %c0_i32_0 : i32, i32
  }
  func.func @transform_9(%arg0: i32) -> (i32, i32, i32) {
    %c0_i32 = arith.constant 0 : i32
    %c0_i32_0 = arith.constant 0 : i32
    %c0_i32_1 = arith.constant 0 : i32
    return %arg0, %c0_i32, %c0_i32_0 : i32, i32, i32
  }
}

module attributes {stable_mosaic.version = 11 : i64} {
  func.func @_transformer_block_kernel(%arg0: i32, %arg1: memref<1x8x32xf32, #tpu.memory_space<vmem>>, %arg2: memref<1x32xf32, #tpu.memory_space<vmem>>, %arg3: memref<32x96xbf16, #tpu.memory_space<vmem>>, %arg4: memref<32x32xbf16, #tpu.memory_space<vmem>>, %arg5: memref<1x32xf32, #tpu.memory_space<vmem>>, %arg6: memref<32x128xbf16, #tpu.memory_space<vmem>>, %arg7: memref<1x128xf32, #tpu.memory_space<vmem>>, %arg8: memref<128x32xbf16, #tpu.memory_space<vmem>>, %arg9: memref<1x32xf32, #tpu.memory_space<vmem>>, %arg10: memref<1x8x32xf32, #tpu.memory_space<vmem>>, %arg11: memref<8x32xf32, #tpu.memory_space<vmem>>) attributes {dimension_semantics = [#tpu.dimension_semantics<parallel>], iteration_bounds = array<i64: 2>, scalar_prefetch = 0 : i64, scratch_operands = 1 : i64, tpu.core_type = #tpu.core_type<tc>, window_params = [{transform_indices = @transform_0, window_bounds = array<i64: 1, 8, 32>}, {pipeline_mode = #tpu.pipeline_mode<synchronous>, transform_indices = @transform_1, window_bounds = array<i64: 1, 32>}, {pipeline_mode = #tpu.pipeline_mode<synchronous>, transform_indices = @transform_2, window_bounds = array<i64: 32, 96>}, {pipeline_mode = #tpu.pipeline_mode<synchronous>, transform_indices = @transform_3, window_bounds = array<i64: 32, 32>}, {pipeline_mode = #tpu.pipeline_mode<synchronous>, transform_indices = @transform_4, window_bounds = array<i64: 1, 32>}, {pipeline_mode = #tpu.pipeline_mode<synchronous>, transform_indices = @transform_5, window_bounds = array<i64: 32, 128>}, {pipeline_mode = #tpu.pipeline_mode<synchronous>, transform_indices = @transform_6, window_bounds = array<i64: 1, 128>}, {pipeline_mode = #tpu.pipeline_mode<synchronous>, transform_indices = @transform_7, window_bounds = array<i64: 128, 32>}, {pipeline_mode = #tpu.pipeline_mode<synchronous>, transform_indices = @transform_8, window_bounds = array<i64: 1, 32>}, {transform_indices = @transform_9, window_bounds = array<i64: 1, 8, 32>}]} {
    %c0 = arith.constant 0 : index
    %c0_0 = arith.constant 0 : index
    %c0_1 = arith.constant 0 : index
    %0 = vector.load %arg1[%c0, %c0_0, %c0_1] : memref<1x8x32xf32, #tpu.memory_space<vmem>>, vector<1x8x32xf32>
    %1 = vector.shape_cast %0 : vector<1x8x32xf32> to vector<8x32xf32>
    %c0_2 = arith.constant 0 : index
    %c0_3 = arith.constant 0 : index
    %2 = vector.load %arg2[%c0_2, %c0_3] : memref<1x32xf32, #tpu.memory_space<vmem>>, vector<1x32xf32>
    %3 = arith.mulf %1, %1 : vector<8x32xf32>
    %cst = arith.constant dense<0.000000e+00> : vector<8xf32>
    %4 = vector.multi_reduction <add>, %3, %cst [1] : vector<8x32xf32> to vector<8xf32>
    %5 = vector.shape_cast %4 : vector<8xf32> to vector<8x1xf32>
    %cst_4 = arith.constant 3.200000e+01 : f32
    %6 = vector.broadcast %cst_4 : f32 to vector<8x1xf32>
    %7 = arith.divf %5, %6 : vector<8x1xf32>
    %cst_5 = arith.constant 9.99999997E-7 : f32
    %8 = vector.broadcast %cst_5 : f32 to vector<8x1xf32>
    %9 = arith.addf %7, %8 : vector<8x1xf32>
    %10 = math.rsqrt %9 : vector<8x1xf32>
    %11 = vector.broadcast %10 : vector<8x1xf32> to vector<8x32xf32>
    %12 = arith.mulf %1, %11 : vector<8x32xf32>
    %13 = vector.broadcast %2 : vector<1x32xf32> to vector<8x32xf32>
    %14 = arith.mulf %12, %13 : vector<8x32xf32>
    %15 = arith.truncf %14 : vector<8x32xf32> to vector<8x32xbf16>
    %c0_6 = arith.constant 0 : index
    %c0_7 = arith.constant 0 : index
    %16 = vector.load %arg3[%c0_6, %c0_7] : memref<32x96xbf16, #tpu.memory_space<vmem>>, vector<32x96xbf16>
    %cst_8 = arith.constant dense<0.000000e+00> : vector<8x96xf32>
    %17 = tpu.matmul %15, %16, %cst_8 {dimension_numbers = #tpu.dot_dimension_numbers<[1], [0], [0], [1], [0, 0, 1, 1], [], []>} : vector<8x32xbf16>, vector<32x96xbf16>, vector<8x96xf32> -> vector<8x96xf32>
    %18 = arith.truncf %17 : vector<8x96xf32> to vector<8x96xbf16>
    %19 = vector.extract_strided_slice %18 {offsets = [0, 0], sizes = [8, 32], strides = [1, 1]} : vector<8x96xbf16> to vector<8x32xbf16>
    %20 = vector.shape_cast %19 : vector<8x32xbf16> to vector<1x8x32xbf16>
    %21 = vector.extract_strided_slice %18 {offsets = [0, 32], sizes = [8, 32], strides = [1, 1]} : vector<8x96xbf16> to vector<8x32xbf16>
    %22 = vector.shape_cast %21 : vector<8x32xbf16> to vector<1x8x32xbf16>
    %23 = vector.extract_strided_slice %18 {offsets = [0, 64], sizes = [8, 32], strides = [1, 1]} : vector<8x96xbf16> to vector<8x32xbf16>
    %24 = vector.shape_cast %23 : vector<8x32xbf16> to vector<1x8x32xbf16>
    "tpu.trace_start"() <{level = 10 : i32, message = "bqd,bkd->bqk"}> : () -> ()
    %cst_9 = arith.constant dense<0.000000e+00> : vector<1x8x8xf32>
    %25 = tpu.matmul %20, %22, %cst_9 {dimension_numbers = #tpu.dot_dimension_numbers<[2], [2], [1], [1], [0, 0, 0, 1, 1, 1], [0], [0]>} : vector<1x8x32xbf16>, vector<1x8x32xbf16>, vector<1x8x8xf32> -> vector<1x8x8xf32>
    "tpu.trace_stop"() : () -> ()
    %cst_10 = arith.constant dense<0xFF800000> : vector<1x8xf32>
    %26 = vector.multi_reduction <maximumf>, %25, %cst_10 [2] : vector<1x8x8xf32> to vector<1x8xf32>
    %27 = vector.shape_cast %26 : vector<1x8xf32> to vector<1x8x1xf32>
    %28 = vector.broadcast %27 : vector<1x8x1xf32> to vector<1x8x8xf32>
    %29 = arith.subf %25, %28 : vector<1x8x8xf32>
    %30 = math.exp %29 : vector<1x8x8xf32>
    %cst_11 = arith.constant dense<0.000000e+00> : vector<1x8xf32>
    %31 = vector.multi_reduction <add>, %30, %cst_11 [2] : vector<1x8x8xf32> to vector<1x8xf32>
    %32 = vector.shape_cast %31 : vector<1x8xf32> to vector<1x8x1xf32>
    %33 = tpu.reciprocal %32 {approx = true} : vector<1x8x1xf32> -> vector<1x8x1xf32>
    %34 = vector.broadcast %33 : vector<1x8x1xf32> to vector<1x8x8xf32>
    %35 = arith.mulf %30, %34 : vector<1x8x8xf32>
    %36 = arith.truncf %35 : vector<1x8x8xf32> to vector<1x8x8xbf16>
    "tpu.trace_start"() <{level = 10 : i32, message = "bqk,bkd->bqd"}> : () -> ()
    %cst_12 = arith.constant dense<0.000000e+00> : vector<1x8x32xf32>
    %37 = tpu.matmul %36, %24, %cst_12 {dimension_numbers = #tpu.dot_dimension_numbers<[2], [1], [1], [2], [0, 0, 0, 1, 1, 2], [0], [0]>} : vector<1x8x8xbf16>, vector<1x8x32xbf16>, vector<1x8x32xf32> -> vector<1x8x32xf32>
    "tpu.trace_stop"() : () -> ()
    %38 = vector.shape_cast %37 : vector<1x8x32xf32> to vector<8x32xf32>
    %39 = arith.truncf %38 : vector<8x32xf32> to vector<8x32xbf16>
    %c0_13 = arith.constant 0 : index
    %c0_14 = arith.constant 0 : index
    %40 = vector.load %arg4[%c0_13, %c0_14] : memref<32x32xbf16, #tpu.memory_space<vmem>>, vector<32x32xbf16>
    %cst_15 = arith.constant dense<0.000000e+00> : vector<8x32xf32>
    %41 = tpu.matmul %39, %40, %cst_15 {dimension_numbers = #tpu.dot_dimension_numbers<[1], [0], [0], [1], [0, 0, 1, 1], [], []>} : vector<8x32xbf16>, vector<32x32xbf16>, vector<8x32xf32> -> vector<8x32xf32>
    %42 = arith.addf %1, %41 : vector<8x32xf32>
    %c0_16 = arith.constant 0 : index
    %c0_17 = arith.constant 0 : index
    %43 = vector.load %arg11[%c0_16, %c0_17] : memref<8x32xf32, #tpu.memory_space<vmem>>, vector<8x32xf32>
    tpu.vector_store %arg11[%c0_16, %c0_17], %42 {strides = array<i32>} : memref<8x32xf32, #tpu.memory_space<vmem>>, vector<8x32xf32>,
    %c0_18 = arith.constant 0 : index
    %c0_19 = arith.constant 0 : index
    %44 = vector.load %arg5[%c0_18, %c0_19] : memref<1x32xf32, #tpu.memory_space<vmem>>, vector<1x32xf32>
    %45 = arith.mulf %42, %42 : vector<8x32xf32>
    %cst_20 = arith.constant dense<0.000000e+00> : vector<8xf32>
    %46 = vector.multi_reduction <add>, %45, %cst_20 [1] : vector<8x32xf32> to vector<8xf32>
    %47 = vector.shape_cast %46 : vector<8xf32> to vector<8x1xf32>
    %cst_21 = arith.constant 3.200000e+01 : f32
    %48 = vector.broadcast %cst_21 : f32 to vector<8x1xf32>
    %49 = arith.divf %47, %48 : vector<8x1xf32>
    %cst_22 = arith.constant 9.99999997E-7 : f32
    %50 = vector.broadcast %cst_22 : f32 to vector<8x1xf32>
    %51 = arith.addf %49, %50 : vector<8x1xf32>
    %52 = math.rsqrt %51 : vector<8x1xf32>
    %53 = vector.broadcast %52 : vector<8x1xf32> to vector<8x32xf32>
    %54 = arith.mulf %42, %53 : vector<8x32xf32>
    %55 = vector.broadcast %44 : vector<1x32xf32> to vector<8x32xf32>
    %56 = arith.mulf %54, %55 : vector<8x32xf32>
    %57 = arith.truncf %56 : vector<8x32xf32> to vector<8x32xbf16>
    %c0_23 = arith.constant 0 : index
    %c0_24 = arith.constant 0 : index
    %58 = vector.load %arg6[%c0_23, %c0_24] : memref<32x128xbf16, #tpu.memory_space<vmem>>, vector<32x128xbf16>
    %cst_25 = arith.constant dense<0.000000e+00> : vector<8x128xf32>
    %59 = tpu.matmul %57, %58, %cst_25 {dimension_numbers = #tpu.dot_dimension_numbers<[1], [0], [0], [1], [0, 0, 1, 1], [], []>} : vector<8x32xbf16>, vector<32x128xbf16>, vector<8x128xf32> -> vector<8x128xf32>
    %c0_26 = arith.constant 0 : index
    %c0_27 = arith.constant 0 : index
    %60 = vector.load %arg7[%c0_26, %c0_27] : memref<1x128xf32, #tpu.memory_space<vmem>>, vector<1x128xf32>
    %61 = vector.broadcast %60 : vector<1x128xf32> to vector<8x128xf32>
    %62 = arith.addf %59, %61 : vector<8x128xf32>
    %cst_28 = arith.constant 0.707106769 : f32
    %63 = vector.broadcast %cst_28 : f32 to vector<8x128xf32>
    %64 = arith.mulf %62, %63 : vector<8x128xf32>
    %65 = math.absf %64 : vector<8x128xf32>
    %cst_29 = arith.constant 0.327591091 : f32
    %66 = vector.broadcast %cst_29 : f32 to vector<8x128xf32>
    %67 = arith.mulf %66, %65 : vector<8x128xf32>
    %cst_30 = arith.constant 1.000000e+00 : f32
    %68 = vector.broadcast %cst_30 : f32 to vector<8x128xf32>
    %69 = arith.addf %68, %67 : vector<8x128xf32>
    %70 = tpu.reciprocal %69 {approx = true} : vector<8x128xf32> -> vector<8x128xf32>
    %cst_31 = arith.constant 1.06140542 : f32
    %71 = vector.broadcast %cst_31 : f32 to vector<8x128xf32>
    %72 = arith.mulf %71, %70 : vector<8x128xf32>
    %cst_32 = arith.constant -1.45315206 : f32
    %73 = vector.broadcast %cst_32 : f32 to vector<8x128xf32>
    %74 = arith.addf %72, %73 : vector<8x128xf32>
    %75 = arith.mulf %74, %70 : vector<8x128xf32>
    %cst_33 = arith.constant 1.42141378 : f32
    %76 = vector.broadcast %cst_33 : f32 to vector<8x128xf32>
    %77 = arith.addf %75, %76 : vector<8x128xf32>
    %78 = arith.mulf %77, %70 : vector<8x128xf32>
    %cst_34 = arith.constant -0.284496725 : f32
    %79 = vector.broadcast %cst_34 : f32 to vector<8x128xf32>
    %80 = arith.addf %78, %79 : vector<8x128xf32>
    %81 = arith.mulf %80, %70 : vector<8x128xf32>
    %cst_35 = arith.constant 0.254829586 : f32
    %82 = vector.broadcast %cst_35 : f32 to vector<8x128xf32>
    %83 = arith.addf %81, %82 : vector<8x128xf32>
    %84 = arith.mulf %83, %70 : vector<8x128xf32>
    %cst_36 = arith.constant 0.000000e+00 : f32
    %85 = vector.broadcast %cst_36 : f32 to vector<8x128xf32>
    %86 = arith.subf %85, %65 : vector<8x128xf32>
    %87 = arith.mulf %86, %65 : vector<8x128xf32>
    %88 = math.exp %87 : vector<8x128xf32>
    %89 = arith.mulf %84, %88 : vector<8x128xf32>
    %cst_37 = arith.constant 1.000000e+00 : f32
    %90 = vector.broadcast %cst_37 : f32 to vector<8x128xf32>
    %91 = arith.subf %90, %89 : vector<8x128xf32>
    %cst_38 = arith.constant 0.000000e+00 : f32
    %92 = vector.broadcast %cst_38 : f32 to vector<8x128xf32>
    %93 = arith.cmpf oge, %64, %92 : vector<8x128xf32>
    %cst_39 = arith.constant 0.000000e+00 : f32
    %94 = vector.broadcast %cst_39 : f32 to vector<8x128xf32>
    %95 = arith.subf %94, %91 : vector<8x128xf32>
    %96 = arith.select %93, %91, %95 : vector<8x128xi1>, vector<8x128xf32>
    %cst_40 = arith.constant 5.000000e-01 : f32
    %97 = vector.broadcast %cst_40 : f32 to vector<8x128xf32>
    %98 = arith.mulf %97, %62 : vector<8x128xf32>
    %cst_41 = arith.constant 1.000000e+00 : f32
    %99 = vector.broadcast %cst_41 : f32 to vector<8x128xf32>
    %100 = arith.addf %99, %96 : vector<8x128xf32>
    %101 = arith.mulf %98, %100 : vector<8x128xf32>
    %102 = arith.truncf %101 : vector<8x128xf32> to vector<8x128xbf16>
    %c0_42 = arith.constant 0 : index
    %c0_43 = arith.constant 0 : index
    %103 = vector.load %arg8[%c0_42, %c0_43] : memref<128x32xbf16, #tpu.memory_space<vmem>>, vector<128x32xbf16>
    %cst_44 = arith.constant dense<0.000000e+00> : vector<8x32xf32>
    %104 = tpu.matmul %102, %103, %cst_44 {dimension_numbers = #tpu.dot_dimension_numbers<[1], [0], [0], [1], [0, 0, 1, 1], [], []>} : vector<8x128xbf16>, vector<128x32xbf16>, vector<8x32xf32> -> vector<8x32xf32>
    %c0_45 = arith.constant 0 : index
    %c0_46 = arith.constant 0 : index
    %105 = vector.load %arg9[%c0_45, %c0_46] : memref<1x32xf32, #tpu.memory_space<vmem>>, vector<1x32xf32>
    %106 = vector.broadcast %105 : vector<1x32xf32> to vector<8x32xf32>
    %107 = arith.addf %104, %106 : vector<8x32xf32>
    %c0_47 = arith.constant 0 : index
    %c0_48 = arith.constant 0 : index
    %108 = vector.load %arg11[%c0_47, %c0_48] : memref<8x32xf32, #tpu.memory_space<vmem>>, vector<8x32xf32>
    %109 = arith.addf %108, %107 : vector<8x32xf32>
    %110 = vector.shape_cast %109 : vector<8x32xf32> to vector<1x8x32xf32>
    %c0_49 = arith.constant 0 : index
    %c0_50 = arith.constant 0 : index
    %c0_51 = arith.constant 0 : index
    %111 = vector.load %arg10[%c0_49, %c0_50, %c0_51] : memref<1x8x32xf32, #tpu.memory_space<vmem>>, vector<1x8x32xf32>
    tpu.vector_store %arg10[%c0_49, %c0_50, %c0_51], %110 {strides = array<i32>} : memref<1x8x32xf32, #tpu.memory_space<vmem>>, vector<1x8x32xf32>,
    return
  }
  func.func @transform_0(%arg0: i32) -> (i32, i32, i32) {
    %c0_i32 = arith.constant 0 : i32
    %c0_i32_0 = arith.constant 0 : i32
    %c0_i32_1 = arith.constant 0 : i32
    return %arg0, %c0_i32, %c0_i32_0 : i32, i32, i32
  }
  func.func @transform_1(%arg0: i32) -> (i32, i32) {
    %c0_i32 = arith.constant 0 : i32
    %c0_i32_0 = arith.constant 0 : i32
    %c0_i32_1 = arith.constant 0 : i32
    return %c0_i32, %c0_i32_0 : i32, i32
  }
  func.func @transform_2(%arg0: i32) -> (i32, i32) {
    %c0_i32 = arith.constant 0 : i32
    %c0_i32_0 = arith.constant 0 : i32
    %c0_i32_1 = arith.constant 0 : i32
    return %c0_i32, %c0_i32_0 : i32, i32
  }
  func.func @transform_3(%arg0: i32) -> (i32, i32) {
    %c0_i32 = arith.constant 0 : i32
    %c0_i32_0 = arith.constant 0 : i32
    %c0_i32_1 = arith.constant 0 : i32
    return %c0_i32, %c0_i32_0 : i32, i32
  }
  func.func @transform_4(%arg0: i32) -> (i32, i32) {
    %c0_i32 = arith.constant 0 : i32
    %c0_i32_0 = arith.constant 0 : i32
    %c0_i32_1 = arith.constant 0 : i32
    return %c0_i32, %c0_i32_0 : i32, i32
  }
  func.func @transform_5(%arg0: i32) -> (i32, i32) {
    %c0_i32 = arith.constant 0 : i32
    %c0_i32_0 = arith.constant 0 : i32
    %c0_i32_1 = arith.constant 0 : i32
    return %c0_i32, %c0_i32_0 : i32, i32
  }
  func.func @transform_6(%arg0: i32) -> (i32, i32) {
    %c0_i32 = arith.constant 0 : i32
    %c0_i32_0 = arith.constant 0 : i32
    %c0_i32_1 = arith.constant 0 : i32
    return %c0_i32, %c0_i32_0 : i32, i32
  }
  func.func @transform_7(%arg0: i32) -> (i32, i32) {
    %c0_i32 = arith.constant 0 : i32
    %c0_i32_0 = arith.constant 0 : i32
    %c0_i32_1 = arith.constant 0 : i32
    return %c0_i32, %c0_i32_0 : i32, i32
  }
  func.func @transform_8(%arg0: i32) -> (i32, i32) {
    %c0_i32 = arith.constant 0 : i32
    %c0_i32_0 = arith.constant 0 : i32
    %c0_i32_1 = arith.constant 0 : i32
    return %c0_i32, %c0_i32_0 : i32, i32
  }
  func.func @transform_9(%arg0: i32) -> (i32, i32, i32) {
    %c0_i32 = arith.constant 0 : i32
    %c0_i32_0 = arith.constant 0 : i32
    %c0_i32_1 = arith.constant 0 : i32
    return %arg0, %c0_i32, %c0_i32_0 : i32, i32, i32
  }
}

</mosaic_0001>

<llo_original>
// kernel: tpu_custom_call.1
$region0: #{tpu_custom_call.1}
  #allocation0 [shape = 'u32[]', space=smem, size = 0x4, offset = 0x4, fixed_abs, tag = 'smem constant byte address 0x4 - core index']
  #allocation1 [shape = 'u32[72,128]{1,0:T(1,128)}', space=vmem, size = 0x9000, scoped, tag = 'internal scratch']
  #allocation2 [shape = 'f32[8,32]{1,0:T(8,128)}', space=vmem, size = 0x1000, scoped, tag = 'scratch operand']
  %s0 = inlined_call_operand.vmem [shape: f32[2,8,32], index: 0, kind: input, shape index: {}]
  %s1 = inlined_call_operand.vmem [shape: f32[1,32], index: 1, kind: input, shape index: {}]
  %s2 = inlined_call_operand.vmem [shape: bf16[32,96], index: 2, kind: input, shape index: {}]
  %s3 = inlined_call_operand.vmem [shape: bf16[32,32], index: 3, kind: input, shape index: {}]
  %s4 = inlined_call_operand.vmem [shape: f32[1,32], index: 4, kind: input, shape index: {}]
  %s5 = inlined_call_operand.vmem [shape: bf16[32,128], index: 5, kind: input, shape index: {}]
  %s6 = inlined_call_operand.vmem [shape: f32[1,128], index: 6, kind: input, shape index: {}]
  %s7 = inlined_call_operand.vmem [shape: bf16[128,32], index: 7, kind: input, shape index: {}]
  %s8 = inlined_call_operand.vmem [shape: f32[1,32], index: 8, kind: input, shape index: {}]
  %s9 = inlined_call_operand.hbm [shape: f32[2,8,32], index: 9, kind: output, shape index: {}]
  %s10 = sld [smem:[#allocation0]]
  $region69: #{tpu_custom_call.1} parent=0
    _
  %s12 = ssub.s32 1, %s10
  %s13 = scalar_select 0, %s12, %s10
  $region1: #{tpu_custom_call.1} parent=0
    #allocation3 [shape = 'u8[8192]{0}', space=vmem, size = 0x2000, scoped, tag = 'output window, operand 0']
    #allocation4 [shape = 's32[2]{0}', space=sflag, size = 0x8, scoped, tag = 'scoped memory for tpu_custom_call.1']
    %14 = vsyncpa [#allocation4], 0
    %s15 = scalar_lea.sflag [#allocation4], 1
    %16 = vsyncpa %s15, 0
    loop: start=0, step=1, limit=4
    $region2: #{tpu_custom_call.1} parent=1 // loop_pre_header
      _
    $region3: #{tpu_custom_call.1} parent=1 // loop_header
      %s18 = sphi 0, %s22
      %p19 = scmp.ge.s32.totalorder %s18, 4
      %s28 = sphi 0, %s30
      %s31 = sphi 0, %s28
      %s32 = sphi 0, %s31
      %s48 = sphi 0, %s32
      %s52 = sphi 0, %s52
      %s54 = sphi 0, %s52
      %s55 = sphi 0, %s54
      %s69 = sphi 0, %s55
      %s73 = sphi 0, %s73
      %s75 = sphi 0, %s73
      %s76 = sphi 0, %s75
      %s90 = sphi 0, %s76
      %s94 = sphi 0, %s94
      %s96 = sphi 0, %s94
      %s97 = sphi 0, %s96
      %s111 = sphi 0, %s97
      %s115 = sphi 0, %s115
      %s117 = sphi 0, %s115
      %s118 = sphi 0, %s117
      %s132 = sphi 0, %s118
      %s136 = sphi 0, %s136
      %s138 = sphi 0, %s136
      %s139 = sphi 0, %s138
      %s153 = sphi 0, %s139
      %s157 = sphi 0, %s157
      %s159 = sphi 0, %s157
      %s160 = sphi 0, %s159
      %s174 = sphi 0, %s160
      %s178 = sphi 0, %s178
      %s180 = sphi 0, %s178
      %s181 = sphi 0, %s180
      %s195 = sphi 0, %s181
      %s199 = sphi 0, %s199
      %s201 = sphi 0, %s199
      %s202 = sphi 0, %s201
      %s216 = sphi 0, %s202
      %s222 = sphi 0, %s224
      %s225 = sphi 0, %s222
      %s226 = sphi 0, %s225
      %s242 = sphi 0, %s226
    $region4: #{tpu_custom_call.1} parent=1 // loop_header_branch
      %21 = sbr.rel (%p19) target = $region8
    $region5: #{tpu_custom_call.1} parent=1 // loop_body
      %s23 = ssub.s32 %s18, 1
      %s24 = ssub.s32 %s18, 2
      %s25 = sadd.s32 %s18, 1
      %s26 = ssub.s32 %s18, %s25
      %p27 = scmp.eq.s32.totalorder %s26, 0
      %s29 = sadd.s32 %s28, 1
      %s30 = scalar_select %p27, %s28, %s29
      %p33 = pneg %p27
      %p34 = scmp.eq.s32.totalorder %s18, 1
      %p35 = por %p33, %p34
      %p36 = scmp.ne.s32.totalorder %s28, %s31
      %p37 = scmp.eq.s32.totalorder %s18, 0
      %p38 = por %p36, %p37
      %p39 = scmp.ne.s32.totalorder %s28, %s31
      %p40 = scmp.eq.s32.totalorder %s23, 1
      %p41 = por %p39, %p40
      %p42 = scmp.ne.s32.totalorder %s31, %s32
      %p43 = scmp.eq.s32.totalorder %s23, 0
      %p44 = por %p42, %p43
      %p45 = scmp.ne.s32.totalorder %s31, %s32
      %p46 = scmp.eq.s32.totalorder %s24, 1
      %p47 = por %p45, %p46
      %p49 = scmp.ne.s32.totalorder %s32, %s48
      %p50 = scmp.eq.s32.totalorder %s24, 0
      %p51 = por %p49, %p50
      %s53 = sadd.s32 %s52, 1
      %p56 = scmp.eq.s32.totalorder %s18, 1
      %p57 = scmp.ne.s32.totalorder %s52, %s54
      %p58 = scmp.eq.s32.totalorder %s18, 0
      %p59 = por %p57, %p58
      %p60 = scmp.ne.s32.totalorder %s52, %s54
      %p61 = scmp.eq.s32.totalorder %s23, 1
      %p62 = por %p60, %p61
      %p63 = scmp.ne.s32.totalorder %s54, %s55
      %p64 = scmp.eq.s32.totalorder %s23, 0
      %p65 = por %p63, %p64
      %p66 = scmp.ne.s32.totalorder %s54, %s55
      %p67 = scmp.eq.s32.totalorder %s24, 1
      %p68 = por %p66, %p67
      %p70 = scmp.ne.s32.totalorder %s55, %s69
      %p71 = scmp.eq.s32.totalorder %s24, 0
      %p72 = por %p70, %p71
      %s74 = sadd.s32 %s73, 1
      %p77 = scmp.eq.s32.totalorder %s18, 1
      %p78 = scmp.ne.s32.totalorder %s73, %s75
      %p79 = scmp.eq.s32.totalorder %s18, 0
      %p80 = por %p78, %p79
      %p81 = scmp.ne.s32.totalorder %s73, %s75
      %p82 = scmp.eq.s32.totalorder %s23, 1
      %p83 = por %p81, %p82
      %p84 = scmp.ne.s32.totalorder %s75, %s76
      %p85 = scmp.eq.s32.totalorder %s23, 0
      %p86 = por %p84, %p85
      %p87 = scmp.ne.s32.totalorder %s75, %s76
      %p88 = scmp.eq.s32.totalorder %s24, 1
      %p89 = por %p87, %p88
      %p91 = scmp.ne.s32.totalorder %s76, %s90
      %p92 = scmp.eq.s32.totalorder %s24, 0
      %p93 = por %p91, %p92
      %s95 = sadd.s32 %s94, 1
      %p98 = scmp.eq.s32.totalorder %s18, 1
      %p99 = scmp.ne.s32.totalorder %s94, %s96
      %p100 = scmp.eq.s32.totalorder %s18, 0
      %p101 = por %p99, %p100
      %p102 = scmp.ne.s32.totalorder %s94, %s96
      %p103 = scmp.eq.s32.totalorder %s23, 1
      %p104 = por %p102, %p103
      %p105 = scmp.ne.s32.totalorder %s96, %s97
      %p106 = scmp.eq.s32.totalorder %s23, 0
      %p107 = por %p105, %p106
      %p108 = scmp.ne.s32.totalorder %s96, %s97
      %p109 = scmp.eq.s32.totalorder %s24, 1
      %p110 = por %p108, %p109
      %p112 = scmp.ne.s32.totalorder %s97, %s111
      %p113 = scmp.eq.s32.totalorder %s24, 0
      %p114 = por %p112, %p113
      %s116 = sadd.s32 %s115, 1
      %p119 = scmp.eq.s32.totalorder %s18, 1
      %p120 = scmp.ne.s32.totalorder %s115, %s117
      %p121 = scmp.eq.s32.totalorder %s18, 0
      %p122 = por %p120, %p121
      %p123 = scmp.ne.s32.totalorder %s115, %s117
      %p124 = scmp.eq.s32.totalorder %s23, 1
      %p125 = por %p123, %p124
      %p126 = scmp.ne.s32.totalorder %s117, %s118
      %p127 = scmp.eq.s32.totalorder %s23, 0
      %p128 = por %p126, %p127
      %p129 = scmp.ne.s32.totalorder %s117, %s118
      %p130 = scmp.eq.s32.totalorder %s24, 1
      %p131 = por %p129, %p130
      %p133 = scmp.ne.s32.totalorder %s118, %s132
      %p134 = scmp.eq.s32.totalorder %s24, 0
      %p135 = por %p133, %p134
      %s137 = sadd.s32 %s136, 1
      %p140 = scmp.eq.s32.totalorder %s18, 1
      %p141 = scmp.ne.s32.totalorder %s136, %s138
      %p142 = scmp.eq.s32.totalorder %s18, 0
      %p143 = por %p141, %p142
      %p144 = scmp.ne.s32.totalorder %s136, %s138
      %p145 = scmp.eq.s32.totalorder %s23, 1
      %p146 = por %p144, %p145
      %p147 = scmp.ne.s32.totalorder %s138, %s139
      %p148 = scmp.eq.s32.totalorder %s23, 0
      %p149 = por %p147, %p148
      %p150 = scmp.ne.s32.totalorder %s138, %s139
      %p151 = scmp.eq.s32.totalorder %s24, 1
      %p152 = por %p150, %p151
      %p154 = scmp.ne.s32.totalorder %s139, %s153
      %p155 = scmp.eq.s32.totalorder %s24, 0
      %p156 = por %p154, %p155
      %s158 = sadd.s32 %s157, 1
      %p161 = scmp.eq.s32.totalorder %s18, 1
      %p162 = scmp.ne.s32.totalorder %s157, %s159
      %p163 = scmp.eq.s32.totalorder %s18, 0
      %p164 = por %p162, %p163
      %p165 = scmp.ne.s32.totalorder %s157, %s159
      %p166 = scmp.eq.s32.totalorder %s23, 1
      %p167 = por %p165, %p166
      %p168 = scmp.ne.s32.totalorder %s159, %s160
      %p169 = scmp.eq.s32.totalorder %s23, 0
      %p170 = por %p168, %p169
      %p171 = scmp.ne.s32.totalorder %s159, %s160
      %p172 = scmp.eq.s32.totalorder %s24, 1
      %p173 = por %p171, %p172
      %p175 = scmp.ne.s32.totalorder %s160, %s174
      %p176 = scmp.eq.s32.totalorder %s24, 0
      %p177 = por %p175, %p176
      %s179 = sadd.s32 %s178, 1
      %p182 = scmp.eq.s32.totalorder %s18, 1
      %p183 = scmp.ne.s32.totalorder %s178, %s180
      %p184 = scmp.eq.s32.totalorder %s18, 0
      %p185 = por %p183, %p184
      %p186 = scmp.ne.s32.totalorder %s178, %s180
      %p187 = scmp.eq.s32.totalorder %s23, 1
      %p188 = por %p186, %p187
      %p189 = scmp.ne.s32.totalorder %s180, %s181
      %p190 = scmp.eq.s32.totalorder %s23, 0
      %p191 = por %p189, %p190
      %p192 = scmp.ne.s32.totalorder %s180, %s181
      %p193 = scmp.eq.s32.totalorder %s24, 1
      %p194 = por %p192, %p193
      %p196 = scmp.ne.s32.totalorder %s181, %s195
      %p197 = scmp.eq.s32.totalorder %s24, 0
      %p198 = por %p196, %p197
      %s200 = sadd.s32 %s199, 1
      %p203 = scmp.eq.s32.totalorder %s18, 1
      %p204 = scmp.ne.s32.totalorder %s199, %s201
      %p205 = scmp.eq.s32.totalorder %s18, 0
      %p206 = por %p204, %p205
      %p207 = scmp.ne.s32.totalorder %s199, %s201
      %p208 = scmp.eq.s32.totalorder %s23, 1
      %p209 = por %p207, %p208
      %p210 = scmp.ne.s32.totalorder %s201, %s202
      %p211 = scmp.eq.s32.totalorder %s23, 0
      %p212 = por %p210, %p211
      %p213 = scmp.ne.s32.totalorder %s201, %s202
      %p214 = scmp.eq.s32.totalorder %s24, 1
      %p215 = por %p213, %p214
      %p217 = scmp.ne.s32.totalorder %s202, %s216
      %p218 = scmp.eq.s32.totalorder %s24, 0
      %p219 = por %p217, %p218
      %s220 = ssub.s32 %s18, %s25
      %p221 = scmp.eq.s32.totalorder %s220, 0
      %s223 = sadd.s32 %s222, 1
      %s224 = scalar_select %p221, %s222, %s223
      %p227 = pneg %p221
      %p228 = scmp.eq.s32.totalorder %s18, 1
      %p229 = por %p227, %p228
      %p230 = scmp.ne.s32.totalorder %s222, %s225
      %p231 = scmp.eq.s32.totalorder %s18, 0
      %p232 = por %p230, %p231
      %p233 = scmp.ne.s32.totalorder %s222, %s225
      %p234 = scmp.eq.s32.totalorder %s23, 1
      %p235 = por %p233, %p234
      %p236 = scmp.ne.s32.totalorder %s225, %s226
      %p237 = scmp.eq.s32.totalorder %s23, 0
      %p238 = por %p236, %p237
      %p239 = scmp.ne.s32.totalorder %s225, %s226
      %p240 = scmp.eq.s32.totalorder %s24, 1
      %p241 = por %p239, %p240
      %p243 = scmp.ne.s32.totalorder %s226, %s242
      %p244 = scmp.eq.s32.totalorder %s24, 0
      %p245 = por %p243, %p244
      %p246 = scmp.le.s32.totalorder 1, %s18
      %p247 = scmp.lt.s32.totalorder %s18, 3
      %p248 = pnand %p246, %p247
      %p249 = pneg %p248
      // Predicated region
      $region9: #{tpu_custom_call.1} parent=5 // pred_check
        _
      $region10: #{tpu_custom_call.1} parent=5 // pred_check_branch
        %251 = sbr.rel (%p248) target = $region12
      $region11: #{tpu_custom_call.1} parent=5 // pred_region
        %s252 = ssub.s32 %s18, 1
        // Predicated region
        $region13: #{tpu_custom_call.1} parent=11 // pred_check
          %p253 = pneg %p65
        $region14: #{tpu_custom_call.1} parent=11 // pred_check_branch
          %255 = sbr.rel (%p253) target = $region16
        $region15: #{tpu_custom_call.1} parent=11 // pred_region
          _
        $region16: #{tpu_custom_call.1} parent=11 // pred_fallthru
          _
        // Predicated region
        $region17: #{tpu_custom_call.1} parent=11 // pred_check
          %p256 = pneg %p86
        $region18: #{tpu_custom_call.1} parent=11 // pred_check_branch
          %258 = sbr.rel (%p256) target = $region20
        $region19: #{tpu_custom_call.1} parent=11 // pred_region
          _
        $region20: #{tpu_custom_call.1} parent=11 // pred_fallthru
          _
        // Predicated region
        $region21: #{tpu_custom_call.1} parent=11 // pred_check
          %p259 = pneg %p107
        $region22: #{tpu_custom_call.1} parent=11 // pred_check_branch
          %261 = sbr.rel (%p259) target = $region24
        $region23: #{tpu_custom_call.1} parent=11 // pred_region
          _
        $region24: #{tpu_custom_call.1} parent=11 // pred_fallthru
          _
        // Predicated region
        $region25: #{tpu_custom_call.1} parent=11 // pred_check
          %p262 = pneg %p128
        $region26: #{tpu_custom_call.1} parent=11 // pred_check_branch
          %264 = sbr.rel (%p262) target = $region28
        $region27: #{tpu_custom_call.1} parent=11 // pred_region
          _
        $region28: #{tpu_custom_call.1} parent=11 // pred_fallthru
          _
        // Predicated region
        $region29: #{tpu_custom_call.1} parent=11 // pred_check
          %p265 = pneg %p149
        $region30: #{tpu_custom_call.1} parent=11 // pred_check_branch
          %267 = sbr.rel (%p265) target = $region32
        $region31: #{tpu_custom_call.1} parent=11 // pred_region
          _
        $region32: #{tpu_custom_call.1} parent=11 // pred_fallthru
          _
        // Predicated region
        $region33: #{tpu_custom_call.1} parent=11 // pred_check
          %p268 = pneg %p170
        $region34: #{tpu_custom_call.1} parent=11 // pred_check_branch
          %270 = sbr.rel (%p268) target = $region36
        $region35: #{tpu_custom_call.1} parent=11 // pred_region
          _
        $region36: #{tpu_custom_call.1} parent=11 // pred_fallthru
          _
        // Predicated region
        $region37: #{tpu_custom_call.1} parent=11 // pred_check
          %p271 = pneg %p191
        $region38: #{tpu_custom_call.1} parent=11 // pred_check_branch
          %273 = sbr.rel (%p271) target = $region40
        $region39: #{tpu_custom_call.1} parent=11 // pred_region
          _
        $region40: #{tpu_custom_call.1} parent=11 // pred_fallthru
          _
        // Predicated region
        $region41: #{tpu_custom_call.1} parent=11 // pred_check
          %p274 = pneg %p212
        $region42: #{tpu_custom_call.1} parent=11 // pred_check_branch
          %276 = sbr.rel (%p274) target = $region44
        $region43: #{tpu_custom_call.1} parent=11 // pred_region
          _
        $region44: #{tpu_custom_call.1} parent=11 // pred_fallthru
          _
      $region12: #{tpu_custom_call.1} parent=5 // pred_fallthru
        _
      %p277 = scmp.lt.s32.totalorder %s18, 2
      // Predicated region
      $region45: #{tpu_custom_call.1} parent=5 // pred_check
        %p278 = pneg %p277
      $region46: #{tpu_custom_call.1} parent=5 // pred_check_branch
        %280 = sbr.rel (%p278) target = $region48
      $region47: #{tpu_custom_call.1} parent=5 // pred_region
        // Predicated region
        $region49: #{tpu_custom_call.1} parent=47 // pred_check
          %p281 = pneg %p38
        $region50: #{tpu_custom_call.1} parent=47 // pred_check_branch
          %283 = sbr.rel (%p281) target = $region52
        $region51: #{tpu_custom_call.1} parent=47 // pred_region
          %p284 = scmp.lt.s32.totalorder %s18, 1
          %s285 = scalar_select %p284, %s18, 1
          %s286 = smul.addr %s285, 8
          %s287 = scalar_lea.vmem %s0, %s286
        $region52: #{tpu_custom_call.1} parent=47 // pred_fallthru
          _
      $region48: #{tpu_custom_call.1} parent=5 // pred_fallthru
        _
      %p288 = scmp.le.s32.totalorder 1, %s18
      %p289 = scmp.lt.s32.totalorder %s18, 3
      %p290 = pnand %p288, %p289
      %p291 = pneg %p290
      // Predicated region
      $region53: #{tpu_custom_call.1} parent=5 // pred_check
        _
      $region54: #{tpu_custom_call.1} parent=5 // pred_check_branch
        %293 = sbr.rel (%p290) target = $region56
      $region55: #{tpu_custom_call.1} parent=5 // pred_region
        %s294 = ssub.s32 %s18, 1
        %p295 = scmp.lt.s32.totalorder %s23, 1
        %s296 = scalar_select %p295, %s23, 1
        %s297 = smul.addr %s296, 8
        %s298 = scalar_lea.vmem %s0, %s297
        %p299 = pneg %p44
        %p300 = pneg %p41
        %p301 = pneg %p65
        %p302 = pneg %p62
        %p303 = pneg %p86
        %p304 = pneg %p83
        %p305 = pneg %p107
        %p306 = pneg %p104
        %p307 = pneg %p128
        %p308 = pneg %p125
        %p309 = pneg %p149
        %p310 = pneg %p146
        %p311 = pneg %p170
        %p312 = pneg %p167
        %p313 = pneg %p191
        %p314 = pneg %p188
        %p315 = pneg %p212
        %p316 = pneg %p209
        %p317 = pneg %p238
        %p318 = pneg %p235
        %s319 = sand.u32 %s225, 1
        %s320 = scalar_lea.sflag [#allocation4], %s319
        %s321 = sand.u32 %s225, 1
        %s322 = smul.addr %s321, 8
        %s323 = scalar_lea.vmem [#allocation3], %s322
        %p324 = scmp.lt.s32.totalorder %s23, 1
        %s325 = scalar_select %p324, %s23, 1
        %s326 = smul.addr %s325, 8
        %s327 = scalar_lea.vmem %s0, %s326
        %v329 = vld [vmem:[%s327] sm:$0xff]
        %v330 = vld [vmem:[%s1] sm:$0x1]
        %v331 = vmul.f32 %v329, %v329
        %vm332 = vcmask 261120
        %v333 = vsel %vm332, %v331, 0.0
        %334 = vadd.xlane.f32.xlu0 %v333
        %v335 = vpop.xlane.xlu0 %334
        %v336 = vrcp.pop 32.0
        %v337 = vmul.f32 32.0, %v336
        %v338 = vsub.f32 1.0, %v337
        %v339 = vmul.f32 %v336, %v338
        %v340 = vadd.f32 %v336, %v339
        %vm341 = vweird.f32 %v336
        %v342 = vsel %vm341, %v336, %v340
        %v343 = vmul.f32 %v335, %v342
        %v344 = vadd.f32 %v343, 1e-06
        %v345 = vrsqrt.pop %v344
        %v346 = vmul.f32 %v345, %v344
        %v347 = vmul.f32 %v346, %v345
        %v348 = vmul.f32 0.5, %v347
        %v349 = vsub.f32 1.5, %v348
        %v350 = vmul.f32 %v345, %v349
        %vm351 = vweird.f32 %v344
        %vm352 = vweird.f32 %v345
        %vm353 = vmor %vm351, %vm352
        %v354 = vsel %vm353, %v345, %v350
        %v355 = vmul.f32 %v329, %v354
        %v357 = vperm.slane %v330, 0
        %v359 = vmul.f32 %v355, %v357
        %v360 = vpack.c.bf16 %v359, %v359
        %v361 = vld [vmem:[%s2] sm:$0xf]
        %v362 = vld [vmem:[%s2 + $0x4] sm:$0xf]
        %v363 = vld [vmem:[%s2 + $0x8] sm:$0xf]
        %v364 = vld [vmem:[%s2 + $0xc] sm:$0xf]
        %v369 = vunpack.c.l.b16 %v361
        %v370 = vunpack.c.l.b16 %v362
        %v371 = vunpack.c.l.b16 %v363
        %v372 = vunpack.c.l.b16 %v364
        %v373 = vpack.c.b16 %v370, %v369
        %v374 = vpack.c.b16 %v372, %v371
        %v378 = vsel %vm332, %v360, 0
        %380 = vmatpush.bf16.msra.mxu0 0
        %381 = vmatpush.bf16.msra.mxu0 0
        %382 = vmatpush.bf16.msra.mxu0 0
        %383 = vmatpush.bf16.msra.mxu0 0
        %384 = vmatpush.bf16.msra.mxu0 0
        %385 = vmatpush.bf16.msra.mxu0 0
        %386 = vmatpush.bf16.msra.mxu0 %v374
        %387 = vmatpush.bf16.msra.mxu0 %v373
        %388 = vmatmul.bf16.gmra.mxu0 %v378
        %v389 = vpop.f32.mrf.mxu0
        %v390 = vadd.f32 0.0, %v389
        %v391 = vpop.f32.mrf.mxu0
        %392 = vdwg.mxu0
        %v393 = vpack.c.bf16 %v390, %v390
        %v395 = vunpack.c.l.b16 %v393
        %v396 = vpack.c.b16 %v395, %v395
        %397 = vrot.lane.b32.xlu0 %v396, 96
        %v398 = vpop.permute.xlu0 %397
        %v400 = vsel %vm332, %v393, 0
        %v403 = vsel %vm332, %v398, 0
        %405 = vmatpush.bf16.xpose.msra.mxu0 0
        %406 = vmatpush.bf16.xpose.msra.mxu0 0
        %407 = vmatpush.bf16.xpose.msra.mxu0 0
        %408 = vmatpush.bf16.xpose.msra.mxu0 0
        %409 = vmatpush.bf16.xpose.msra.mxu0 0
        %410 = vmatpush.bf16.xpose.msra.mxu0 0
        %411 = vmatpush.bf16.xpose.msra.mxu0 0
        %412 = vmatpush.bf16.xpose.msra.mxu0 %v403
        %413 = vmatmul.bf16.gmra.mxu0 %v400
        %v414 = vpop.f32.mrf.mxu0
        %v415 = vadd.f32 0.0, %v414
        %v416 = vpop.f32.mrf.mxu0
        %417 = vdwg.mxu0
        %vm418 = vcmask 64512
        %v419 = vsel %vm418, %v415, -inf
        %420 = vmax.xlane.f32.xlu0 %v419
        %v421 = vpop.xlane.xlu0 %420
        %v422 = vsub.f32 %v415, %v421
        %v423 = vmul.f32 %v422, 1.442695
        %v424 = vpow.pop %v423
        %v425 = vsel %vm418, %v424, 0.0
        %426 = vadd.xlane.f32.xlu0 %v425
        %v427 = vpop.xlane.xlu0 %426
        %v428 = vrcp.pop %v427
        %v429 = vmul.f32 %v424, %v428
        %v430 = vpack.c.bf16 %v429, %v429
        %431 = vrot.lane.b32.xlu0 %v396, 64
        %v432 = vpop.permute.xlu0 %431
        %v434 = vsel %vm418, %v430, 0
        %vm436 = vcmask 1043456
        %v438 = vsel %vm436, %v432, 0
        %440 = vmatpush.bf16.msra.mxu0 0
        %441 = vmatpush.bf16.msra.mxu0 0
        %442 = vmatpush.bf16.msra.mxu0 0
        %443 = vmatpush.bf16.msra.mxu0 0
        %444 = vmatpush.bf16.msra.mxu0 0
        %445 = vmatpush.bf16.msra.mxu0 0
        %446 = vmatpush.bf16.msra.mxu0 0
        %447 = vmatpush.bf16.msra.mxu0 %v438
        %448 = vmatmul.bf16.gmra.mxu0 %v434
        %v449 = vpop.f32.mrf.mxu0
        %v450 = vadd.f32 0.0, %v449
        %v451 = vpop.f32.mrf.mxu0
        %452 = vdwg.mxu0
        %v453 = vpack.c.bf16 %v450, %v450
        %v454 = vld [vmem:[%s3] sm:$0xf]
        %v455 = vld [vmem:[%s3 + $0x4] sm:$0xf]
        %v456 = vld [vmem:[%s3 + $0x8] sm:$0xf]
        %v457 = vld [vmem:[%s3 + $0xc] sm:$0xf]
        %v462 = vunpack.c.l.b16 %v454
        %v463 = vunpack.c.l.b16 %v455
        %v464 = vunpack.c.l.b16 %v456
        %v465 = vunpack.c.l.b16 %v457
        %v466 = vpack.c.b16 %v463, %v462
        %v467 = vpack.c.b16 %v465, %v464
        %v471 = vsel %vm332, %v453, 0
        %473 = vmatpush.bf16.msra.mxu0 0
        %474 = vmatpush.bf16.msra.mxu0 0
        %475 = vmatpush.bf16.msra.mxu0 0
        %476 = vmatpush.bf16.msra.mxu0 0
        %477 = vmatpush.bf16.msra.mxu0 0
        %478 = vmatpush.bf16.msra.mxu0 0
        %479 = vmatpush.bf16.msra.mxu0 %v467
        %480 = vmatpush.bf16.msra.mxu0 %v466
        %481 = vmatmul.bf16.gmra.mxu0 %v471
        %v482 = vpop.f32.mrf.mxu0
        %v483 = vadd.f32 0.0, %v482
        %v484 = vpop.f32.mrf.mxu0
        %485 = vdwg.mxu0
        %v486 = vadd.f32 %v329, %v483
        %487 = vst.msk [vmem:[#allocation2] sm:$0xff] %vm332, %v486
        %v488 = vld [vmem:[%s4] sm:$0x1]
        %v489 = vmul.f32 %v486, %v486
        %v490 = vsel %vm332, %v489, 0.0
        %491 = vadd.xlane.f32.xlu0 %v490
        %v492 = vpop.xlane.xlu0 %491
        %v493 = vmul.f32 %v492, %v342
        %v494 = vadd.f32 %v493, 1e-06
        %v495 = vrsqrt.pop %v494
        %v496 = vmul.f32 %v495, %v494
        %v497 = vmul.f32 %v496, %v495
        %v498 = vmul.f32 0.5, %v497
        %v499 = vsub.f32 1.5, %v498
        %v500 = vmul.f32 %v495, %v499
        %vm501 = vweird.f32 %v494
        %vm502 = vweird.f32 %v495
        %vm503 = vmor %vm501, %vm502
        %v504 = vsel %vm503, %v495, %v500
        %v505 = vmul.f32 %v486, %v504
        %v507 = vperm.slane %v488, 0
        %v509 = vmul.f32 %v505, %v507
        %v510 = vpack.c.bf16 %v509, %v509
        %v511 = vld [vmem:[%s5] sm:$0xf]
        %v512 = vld [vmem:[%s5 + $0x4] sm:$0xf]
        %v513 = vld [vmem:[%s5 + $0x8] sm:$0xf]
        %v514 = vld [vmem:[%s5 + $0xc] sm:$0xf]
        %v515 = vld [vmem:[%s6] sm:$0x1]
        %v517 = vperm.slane %v515, 0
        %v523 = vunpack.c.l.b16 %v511
        %v524 = vunpack.c.l.b16 %v512
        %v525 = vunpack.c.l.b16 %v513
        %v526 = vunpack.c.l.b16 %v514
        %v527 = vpack.c.b16 %v524, %v523
        %v528 = vpack.c.b16 %v526, %v525
        %v532 = vsel %vm332, %v510, 0
        %534 = vmatpush.bf16.msra.mxu0 0
        %535 = vmatpush.bf16.msra.mxu0 0
        %536 = vmatpush.bf16.msra.mxu0 0
        %537 = vmatpush.bf16.msra.mxu0 0
        %538 = vmatpush.bf16.msra.mxu0 0
        %539 = vmatpush.bf16.msra.mxu0 0
        %540 = vmatpush.bf16.msra.mxu0 %v528
        %541 = vmatpush.bf16.msra.mxu0 %v527
        %542 = vmatmul.bf16.gmra.mxu0 %v532
        %v543 = vpop.f32.mrf.mxu0
        %v544 = vadd.f32 %v517, %v543
        %v545 = vpop.f32.mrf.mxu0
        %546 = vdwg.mxu0
        %v547 = vmul.f32 %v544, 0.70710677
        %v548 = vand.u32 2147483647, %v547
        %v549 = vmul.f32 %v548, 0.3275911
        %v550 = vadd.f32 %v549, 1.0
        %v551 = vrcp.pop %v550
        %v552 = vmul.f32 %v551, 1.0614054
        %v553 = vadd.f32 %v552, -1.4531521
        %v554 = vmul.f32 %v553, %v551
        %v555 = vadd.f32 %v554, 1.4214138
        %v556 = vmul.f32 %v555, %v551
        %v557 = vadd.f32 %v556, -0.28449672
        %v558 = vmul.f32 %v557, %v551
        %v559 = vadd.f32 %v558, 0.2548296
        %v560 = vmul.f32 %v559, %v551
        %v561 = vsub.f32 0.0, %v548
        %v562 = vmul.f32 %v561, %v548
        %v563 = vmul.f32 %v562, 1.442695
        %v564 = vpow.pop %v563
        %v565 = vmul.f32 %v560, %v564
        %v566 = vsub.f32 1.0, %v565
        %vm567 = vcmp.ge.f32.partialorder %v547, 0.0
        %v568 = vsub.f32 0.0, %v566
        %v569 = vsel %vm567, %v566, %v568
        %v570 = vmul.f32 %v544, 0.5
        %v571 = vadd.f32 %v569, 1.0
        %v572 = vmul.f32 %v570, %v571
        %v573 = vpack.c.bf16 %v572, %v572
        %v574 = vld [vmem:[%s7] sm:$0xf]
        %v575 = vld [vmem:[%s7 + $0x4] sm:$0xf]
        %v576 = vld [vmem:[%s7 + $0x8] sm:$0xf]
        %v577 = vld [vmem:[%s7 + $0xc] sm:$0xf]
        %v578 = vld [vmem:[%s7 + $0x10] sm:$0xf]
        %v579 = vld [vmem:[%s7 + $0x14] sm:$0xf]
        %v580 = vld [vmem:[%s7 + $0x18] sm:$0xf]
        %v581 = vld [vmem:[%s7 + $0x1c] sm:$0xf]
        %v582 = vld [vmem:[%s7 + $0x20] sm:$0xf]
        %v583 = vld [vmem:[%s7 + $0x24] sm:$0xf]
        %v584 = vld [vmem:[%s7 + $0x28] sm:$0xf]
        %v585 = vld [vmem:[%s7 + $0x2c] sm:$0xf]
        %v586 = vld [vmem:[%s7 + $0x30] sm:$0xf]
        %v587 = vld [vmem:[%s7 + $0x34] sm:$0xf]
        %v588 = vld [vmem:[%s7 + $0x38] sm:$0xf]
        %v589 = vld [vmem:[%s7 + $0x3c] sm:$0xf]
        %v590 = vld [vmem:[%s8] sm:$0x1]
        %v592 = vperm.slane %v590, 0
        %v610 = vunpack.c.l.b16 %v574
        %v611 = vunpack.c.l.b16 %v575
        %v612 = vunpack.c.l.b16 %v576
        %v613 = vunpack.c.l.b16 %v577
        %v614 = vunpack.c.l.b16 %v578
        %v615 = vunpack.c.l.b16 %v579
        %v616 = vunpack.c.l.b16 %v580
        %v617 = vunpack.c.l.b16 %v581
        %v618 = vunpack.c.l.b16 %v582
        %v619 = vunpack.c.l.b16 %v583
        %v620 = vunpack.c.l.b16 %v584
        %v621 = vunpack.c.l.b16 %v585
        %v622 = vunpack.c.l.b16 %v586
        %v623 = vunpack.c.l.b16 %v587
        %v624 = vunpack.c.l.b16 %v588
        %v625 = vunpack.c.l.b16 %v589
        %v626 = vpack.c.b16 %v611, %v610
        %v627 = vpack.c.b16 %v613, %v612
        %v628 = vpack.c.b16 %v615, %v614
        %v629 = vpack.c.b16 %v617, %v616
        %v630 = vpack.c.b16 %v619, %v618
        %v631 = vpack.c.b16 %v621, %v620
        %v632 = vpack.c.b16 %v623, %v622
        %v633 = vpack.c.b16 %v625, %v624
        %642 = vmatpush.bf16.msra.mxu0 %v633
        %643 = vmatpush.bf16.msra.mxu0 %v632
        %644 = vmatpush.bf16.msra.mxu0 %v631
        %645 = vmatpush.bf16.msra.mxu0 %v630
        %646 = vmatpush.bf16.msra.mxu0 %v629
        %647 = vmatpush.bf16.msra.mxu0 %v628
        %648 = vmatpush.bf16.msra.mxu0 %v627
        %649 = vmatpush.bf16.msra.mxu0 %v626
        %650 = vmatmul.bf16.gmra.mxu0 %v573
        %v651 = vpop.f32.mrf.mxu0
        %v652 = vadd.f32 %v592, %v651
        %v653 = vpop.f32.mrf.mxu0
        %654 = vdwg.mxu0
        %v655 = vld [vmem:[#allocation2] sm:$0xff]
        %v656 = vadd.f32 %v655, %v652
        %657 = vst.msk [vmem:[%s323] sm:$0xff] %vm332, %v656
        %s658 = sand.u32 %s225, 1
        %s659 = scalar_lea.sflag [#allocation4], %s658
        %s660 = sand.u32 %s225, 1
        %s661 = smul.addr %s660, 8
        %s662 = scalar_lea.vmem [#allocation3], %s661
        // Predicated region
        $region57: #{tpu_custom_call.1} parent=55 // pred_check
          %p663 = pneg %p235
        $region58: #{tpu_custom_call.1} parent=55 // pred_check_branch
          %665 = sbr.rel (%p663) target = $region60
        $region59: #{tpu_custom_call.1} parent=55 // pred_region
          %667 = vsyncadd %s659, 0
          %s668 = smul.addr %s23, 8
          %s669 = scalar_lea.hbm %s9, %s668
          %s671 = sshll.u32 %s662, 4
          %s672 = int_to_ptr.vmem [resolvable:$true] %s671
          %s673 = sshll.u32 %s669, 4
          %s674 = int_to_ptr.hbm [resolvable:$true] %s673
          %676 = dma.vmem_to_hbm [thread:$0]  %s672, 128, %s674, %s659
        $region60: #{tpu_custom_call.1} parent=55 // pred_fallthru
          _
      $region56: #{tpu_custom_call.1} parent=5 // pred_fallthru
        _
      %p677 = scmp.le.s32.totalorder 2, %s18
      // Predicated region
      $region61: #{tpu_custom_call.1} parent=5 // pred_check
        %p678 = pneg %p677
      $region62: #{tpu_custom_call.1} parent=5 // pred_check_branch
        %680 = sbr.rel (%p678) target = $region64
      $region63: #{tpu_custom_call.1} parent=5 // pred_region
        %s681 = ssub.s32 %s18, 2
        // Predicated region
        $region65: #{tpu_custom_call.1} parent=63 // pred_check
          %p682 = pneg %p241
        $region66: #{tpu_custom_call.1} parent=63 // pred_check_branch
          %684 = sbr.rel (%p682) target = $region68
        $region67: #{tpu_custom_call.1} parent=63 // pred_region
          %s685 = sand.u32 %s226, 1
          %s686 = scalar_lea.sflag [#allocation4], %s685
          %s687 = sand.u32 %s226, 1
          %s688 = smul.addr %s687, 8
          %s689 = scalar_lea.vmem [#allocation3], %s688
          %691 = dma.done %s686, 128
        $region68: #{tpu_custom_call.1} parent=63 // pred_fallthru
          _
      $region64: #{tpu_custom_call.1} parent=5 // pred_fallthru
        _
    $region6: #{tpu_custom_call.1} parent=1 // loop_footer
      %s22 = sadd.s32 1, %s18
    $region7: #{tpu_custom_call.1} parent=1 // loop_footer_branch
      %17 = sbr.rel target = $region3
    $region8: #{tpu_custom_call.1} parent=1 // loop_exit
      _
    %692 = vsyncpa [#allocation4], 1
    %s693 = scalar_lea.sflag [#allocation4], 1
    %694 = vsyncpa %s693, 1

// kernel: tpu_custom_call.1
$region0: #{tpu_custom_call.1}
  #allocation0 [shape = 'u32[]', space=smem, size = 0x4, offset = 0x4, fixed_abs, tag = 'smem constant byte address 0x4 - core index']
  #allocation1 [shape = 'u32[72,128]{1,0:T(1,128)}', space=vmem, size = 0x9000, scoped, tag = 'internal scratch']
  #allocation2 [shape = 'f32[8,32]{1,0:T(8,128)}', space=vmem, size = 0x1000, scoped, tag = 'scratch operand']
  %s0 = inlined_call_operand.vmem [shape: f32[2,8,32], index: 0, kind: input, shape index: {}]
  %s1 = inlined_call_operand.vmem [shape: f32[1,32], index: 1, kind: input, shape index: {}]
  %s2 = inlined_call_operand.vmem [shape: bf16[32,96], index: 2, kind: input, shape index: {}]
  %s3 = inlined_call_operand.vmem [shape: bf16[32,32], index: 3, kind: input, shape index: {}]
  %s4 = inlined_call_operand.vmem [shape: f32[1,32], index: 4, kind: input, shape index: {}]
  %s5 = inlined_call_operand.vmem [shape: bf16[32,128], index: 5, kind: input, shape index: {}]
  %s6 = inlined_call_operand.vmem [shape: f32[1,128], index: 6, kind: input, shape index: {}]
  %s7 = inlined_call_operand.vmem [shape: bf16[128,32], index: 7, kind: input, shape index: {}]
  %s8 = inlined_call_operand.vmem [shape: f32[1,32], index: 8, kind: input, shape index: {}]
  %s9 = inlined_call_operand.hbm [shape: f32[2,8,32], index: 9, kind: output, shape index: {}]
  %s10 = sld [smem:[#allocation0]]
  $region69: #{tpu_custom_call.1} parent=0
    _
  %s12 = ssub.s32 1, %s10
  %s13 = scalar_select 0, %s12, %s10
  $region1: #{tpu_custom_call.1} parent=0
    #allocation3 [shape = 'u8[8192]{0}', space=vmem, size = 0x2000, scoped, tag = 'output window, operand 0']
    #allocation4 [shape = 's32[2]{0}', space=sflag, size = 0x8, scoped, tag = 'scoped memory for tpu_custom_call.1']
    %14 = vsyncpa [#allocation4], 0
    %s15 = scalar_lea.sflag [#allocation4], 1
    %16 = vsyncpa %s15, 0
    loop: start=0, step=1, limit=4
    $region2: #{tpu_custom_call.1} parent=1 // loop_pre_header
      _
    $region3: #{tpu_custom_call.1} parent=1 // loop_header
      %s18 = sphi 0, %s22
      %p19 = scmp.ge.s32.totalorder %s18, 4
      %s28 = sphi 0, %s30
      %s31 = sphi 0, %s28
      %s32 = sphi 0, %s31
      %s48 = sphi 0, %s32
      %s52 = sphi 0, %s52
      %s54 = sphi 0, %s52
      %s55 = sphi 0, %s54
      %s69 = sphi 0, %s55
      %s73 = sphi 0, %s73
      %s75 = sphi 0, %s73
      %s76 = sphi 0, %s75
      %s90 = sphi 0, %s76
      %s94 = sphi 0, %s94
      %s96 = sphi 0, %s94
      %s97 = sphi 0, %s96
      %s111 = sphi 0, %s97
      %s115 = sphi 0, %s115
      %s117 = sphi 0, %s115
      %s118 = sphi 0, %s117
      %s132 = sphi 0, %s118
      %s136 = sphi 0, %s136
      %s138 = sphi 0, %s136
      %s139 = sphi 0, %s138
      %s153 = sphi 0, %s139
      %s157 = sphi 0, %s157
      %s159 = sphi 0, %s157
      %s160 = sphi 0, %s159
      %s174 = sphi 0, %s160
      %s178 = sphi 0, %s178
      %s180 = sphi 0, %s178
      %s181 = sphi 0, %s180
      %s195 = sphi 0, %s181
      %s199 = sphi 0, %s199
      %s201 = sphi 0, %s199
      %s202 = sphi 0, %s201
      %s216 = sphi 0, %s202
      %s222 = sphi 0, %s224
      %s225 = sphi 0, %s222
      %s226 = sphi 0, %s225
      %s242 = sphi 0, %s226
    $region4: #{tpu_custom_call.1} parent=1 // loop_header_branch
      %21 = sbr.rel (%p19) target = $region8
    $region5: #{tpu_custom_call.1} parent=1 // loop_body
      %s23 = ssub.s32 %s18, 1
      %s24 = ssub.s32 %s18, 2
      %s25 = sadd.s32 %s18, 1
      %s26 = ssub.s32 %s18, %s25
      %p27 = scmp.eq.s32.totalorder %s26, 0
      %s29 = sadd.s32 %s28, 1
      %s30 = scalar_select %p27, %s28, %s29
      %p33 = pneg %p27
      %p34 = scmp.eq.s32.totalorder %s18, 1
      %p35 = por %p33, %p34
      %p36 = scmp.ne.s32.totalorder %s28, %s31
      %p37 = scmp.eq.s32.totalorder %s18, 0
      %p38 = por %p36, %p37
      %p39 = scmp.ne.s32.totalorder %s28, %s31
      %p40 = scmp.eq.s32.totalorder %s23, 1
      %p41 = por %p39, %p40
      %p42 = scmp.ne.s32.totalorder %s31, %s32
      %p43 = scmp.eq.s32.totalorder %s23, 0
      %p44 = por %p42, %p43
      %p45 = scmp.ne.s32.totalorder %s31, %s32
      %p46 = scmp.eq.s32.totalorder %s24, 1
      %p47 = por %p45, %p46
      %p49 = scmp.ne.s32.totalorder %s32, %s48
      %p50 = scmp.eq.s32.totalorder %s24, 0
      %p51 = por %p49, %p50
      %s53 = sadd.s32 %s52, 1
      %p56 = scmp.eq.s32.totalorder %s18, 1
      %p57 = scmp.ne.s32.totalorder %s52, %s54
      %p58 = scmp.eq.s32.totalorder %s18, 0
      %p59 = por %p57, %p58
      %p60 = scmp.ne.s32.totalorder %s52, %s54
      %p61 = scmp.eq.s32.totalorder %s23, 1
      %p62 = por %p60, %p61
      %p63 = scmp.ne.s32.totalorder %s54, %s55
      %p64 = scmp.eq.s32.totalorder %s23, 0
      %p65 = por %p63, %p64
      %p66 = scmp.ne.s32.totalorder %s54, %s55
      %p67 = scmp.eq.s32.totalorder %s24, 1
      %p68 = por %p66, %p67
      %p70 = scmp.ne.s32.totalorder %s55, %s69
      %p71 = scmp.eq.s32.totalorder %s24, 0
      %p72 = por %p70, %p71
      %s74 = sadd.s32 %s73, 1
      %p77 = scmp.eq.s32.totalorder %s18, 1
      %p78 = scmp.ne.s32.totalorder %s73, %s75
      %p79 = scmp.eq.s32.totalorder %s18, 0
      %p80 = por %p78, %p79
      %p81 = scmp.ne.s32.totalorder %s73, %s75
      %p82 = scmp.eq.s32.totalorder %s23, 1
      %p83 = por %p81, %p82
      %p84 = scmp.ne.s32.totalorder %s75, %s76
      %p85 = scmp.eq.s32.totalorder %s23, 0
      %p86 = por %p84, %p85
      %p87 = scmp.ne.s32.totalorder %s75, %s76
      %p88 = scmp.eq.s32.totalorder %s24, 1
      %p89 = por %p87, %p88
      %p91 = scmp.ne.s32.totalorder %s76, %s90
      %p92 = scmp.eq.s32.totalorder %s24, 0
      %p93 = por %p91, %p92
      %s95 = sadd.s32 %s94, 1
      %p98 = scmp.eq.s32.totalorder %s18, 1
      %p99 = scmp.ne.s32.totalorder %s94, %s96
      %p100 = scmp.eq.s32.totalorder %s18, 0
      %p101 = por %p99, %p100
      %p102 = scmp.ne.s32.totalorder %s94, %s96
      %p103 = scmp.eq.s32.totalorder %s23, 1
      %p104 = por %p102, %p103
      %p105 = scmp.ne.s32.totalorder %s96, %s97
      %p106 = scmp.eq.s32.totalorder %s23, 0
      %p107 = por %p105, %p106
      %p108 = scmp.ne.s32.totalorder %s96, %s97
      %p109 = scmp.eq.s32.totalorder %s24, 1
      %p110 = por %p108, %p109
      %p112 = scmp.ne.s32.totalorder %s97, %s111
      %p113 = scmp.eq.s32.totalorder %s24, 0
      %p114 = por %p112, %p113
      %s116 = sadd.s32 %s115, 1
      %p119 = scmp.eq.s32.totalorder %s18, 1
      %p120 = scmp.ne.s32.totalorder %s115, %s117
      %p121 = scmp.eq.s32.totalorder %s18, 0
      %p122 = por %p120, %p121
      %p123 = scmp.ne.s32.totalorder %s115, %s117
      %p124 = scmp.eq.s32.totalorder %s23, 1
      %p125 = por %p123, %p124
      %p126 = scmp.ne.s32.totalorder %s117, %s118
      %p127 = scmp.eq.s32.totalorder %s23, 0
      %p128 = por %p126, %p127
      %p129 = scmp.ne.s32.totalorder %s117, %s118
      %p130 = scmp.eq.s32.totalorder %s24, 1
      %p131 = por %p129, %p130
      %p133 = scmp.ne.s32.totalorder %s118, %s132
      %p134 = scmp.eq.s32.totalorder %s24, 0
      %p135 = por %p133, %p134
      %s137 = sadd.s32 %s136, 1
      %p140 = scmp.eq.s32.totalorder %s18, 1
      %p141 = scmp.ne.s32.totalorder %s136, %s138
      %p142 = scmp.eq.s32.totalorder %s18, 0
      %p143 = por %p141, %p142
      %p144 = scmp.ne.s32.totalorder %s136, %s138
      %p145 = scmp.eq.s32.totalorder %s23, 1
      %p146 = por %p144, %p145
      %p147 = scmp.ne.s32.totalorder %s138, %s139
      %p148 = scmp.eq.s32.totalorder %s23, 0
      %p149 = por %p147, %p148
      %p150 = scmp.ne.s32.totalorder %s138, %s139
      %p151 = scmp.eq.s32.totalorder %s24, 1
      %p152 = por %p150, %p151
      %p154 = scmp.ne.s32.totalorder %s139, %s153
      %p155 = scmp.eq.s32.totalorder %s24, 0
      %p156 = por %p154, %p155
      %s158 = sadd.s32 %s157, 1
      %p161 = scmp.eq.s32.totalorder %s18, 1
      %p162 = scmp.ne.s32.totalorder %s157, %s159
      %p163 = scmp.eq.s32.totalorder %s18, 0
      %p164 = por %p162, %p163
      %p165 = scmp.ne.s32.totalorder %s157, %s159
      %p166 = scmp.eq.s32.totalorder %s23, 1
      %p167 = por %p165, %p166
      %p168 = scmp.ne.s32.totalorder %s159, %s160
      %p169 = scmp.eq.s32.totalorder %s23, 0
      %p170 = por %p168, %p169
      %p171 = scmp.ne.s32.totalorder %s159, %s160
      %p172 = scmp.eq.s32.totalorder %s24, 1
      %p173 = por %p171, %p172
      %p175 = scmp.ne.s32.totalorder %s160, %s174
      %p176 = scmp.eq.s32.totalorder %s24, 0
      %p177 = por %p175, %p176
      %s179 = sadd.s32 %s178, 1
      %p182 = scmp.eq.s32.totalorder %s18, 1
      %p183 = scmp.ne.s32.totalorder %s178, %s180
      %p184 = scmp.eq.s32.totalorder %s18, 0
      %p185 = por %p183, %p184
      %p186 = scmp.ne.s32.totalorder %s178, %s180
      %p187 = scmp.eq.s32.totalorder %s23, 1
      %p188 = por %p186, %p187
      %p189 = scmp.ne.s32.totalorder %s180, %s181
      %p190 = scmp.eq.s32.totalorder %s23, 0
      %p191 = por %p189, %p190
      %p192 = scmp.ne.s32.totalorder %s180, %s181
      %p193 = scmp.eq.s32.totalorder %s24, 1
      %p194 = por %p192, %p193
      %p196 = scmp.ne.s32.totalorder %s181, %s195
      %p197 = scmp.eq.s32.totalorder %s24, 0
      %p198 = por %p196, %p197
      %s200 = sadd.s32 %s199, 1
      %p203 = scmp.eq.s32.totalorder %s18, 1
      %p204 = scmp.ne.s32.totalorder %s199, %s201
      %p205 = scmp.eq.s32.totalorder %s18, 0
      %p206 = por %p204, %p205
      %p207 = scmp.ne.s32.totalorder %s199, %s201
      %p208 = scmp.eq.s32.totalorder %s23, 1
      %p209 = por %p207, %p208
      %p210 = scmp.ne.s32.totalorder %s201, %s202
      %p211 = scmp.eq.s32.totalorder %s23, 0
      %p212 = por %p210, %p211
      %p213 = scmp.ne.s32.totalorder %s201, %s202
      %p214 = scmp.eq.s32.totalorder %s24, 1
      %p215 = por %p213, %p214
      %p217 = scmp.ne.s32.totalorder %s202, %s216
      %p218 = scmp.eq.s32.totalorder %s24, 0
      %p219 = por %p217, %p218
      %s220 = ssub.s32 %s18, %s25
      %p221 = scmp.eq.s32.totalorder %s220, 0
      %s223 = sadd.s32 %s222, 1
      %s224 = scalar_select %p221, %s222, %s223
      %p227 = pneg %p221
      %p228 = scmp.eq.s32.totalorder %s18, 1
      %p229 = por %p227, %p228
      %p230 = scmp.ne.s32.totalorder %s222, %s225
      %p231 = scmp.eq.s32.totalorder %s18, 0
      %p232 = por %p230, %p231
      %p233 = scmp.ne.s32.totalorder %s222, %s225
      %p234 = scmp.eq.s32.totalorder %s23, 1
      %p235 = por %p233, %p234
      %p236 = scmp.ne.s32.totalorder %s225, %s226
      %p237 = scmp.eq.s32.totalorder %s23, 0
      %p238 = por %p236, %p237
      %p239 = scmp.ne.s32.totalorder %s225, %s226
      %p240 = scmp.eq.s32.totalorder %s24, 1
      %p241 = por %p239, %p240
      %p243 = scmp.ne.s32.totalorder %s226, %s242
      %p244 = scmp.eq.s32.totalorder %s24, 0
      %p245 = por %p243, %p244
      %p246 = scmp.le.s32.totalorder 1, %s18
      %p247 = scmp.lt.s32.totalorder %s18, 3
      %p248 = pnand %p246, %p247
      %p249 = pneg %p248
      // Predicated region
      $region9: #{tpu_custom_call.1} parent=5 // pred_check
        _
      $region10: #{tpu_custom_call.1} parent=5 // pred_check_branch
        %251 = sbr.rel (%p248) target = $region12
      $region11: #{tpu_custom_call.1} parent=5 // pred_region
        %s252 = ssub.s32 %s18, 1
        // Predicated region
        $region13: #{tpu_custom_call.1} parent=11 // pred_check
          %p253 = pneg %p65
        $region14: #{tpu_custom_call.1} parent=11 // pred_check_branch
          %255 = sbr.rel (%p253) target = $region16
        $region15: #{tpu_custom_call.1} parent=11 // pred_region
          _
        $region16: #{tpu_custom_call.1} parent=11 // pred_fallthru
          _
        // Predicated region
        $region17: #{tpu_custom_call.1} parent=11 // pred_check
          %p256 = pneg %p86
        $region18: #{tpu_custom_call.1} parent=11 // pred_check_branch
          %258 = sbr.rel (%p256) target = $region20
        $region19: #{tpu_custom_call.1} parent=11 // pred_region
          _
        $region20: #{tpu_custom_call.1} parent=11 // pred_fallthru
          _
        // Predicated region
        $region21: #{tpu_custom_call.1} parent=11 // pred_check
          %p259 = pneg %p107
        $region22: #{tpu_custom_call.1} parent=11 // pred_check_branch
          %261 = sbr.rel (%p259) target = $region24
        $region23: #{tpu_custom_call.1} parent=11 // pred_region
          _
        $region24: #{tpu_custom_call.1} parent=11 // pred_fallthru
          _
        // Predicated region
        $region25: #{tpu_custom_call.1} parent=11 // pred_check
          %p262 = pneg %p128
        $region26: #{tpu_custom_call.1} parent=11 // pred_check_branch
          %264 = sbr.rel (%p262) target = $region28
        $region27: #{tpu_custom_call.1} parent=11 // pred_region
          _
        $region28: #{tpu_custom_call.1} parent=11 // pred_fallthru
          _
        // Predicated region
        $region29: #{tpu_custom_call.1} parent=11 // pred_check
          %p265 = pneg %p149
        $region30: #{tpu_custom_call.1} parent=11 // pred_check_branch
          %267 = sbr.rel (%p265) target = $region32
        $region31: #{tpu_custom_call.1} parent=11 // pred_region
          _
        $region32: #{tpu_custom_call.1} parent=11 // pred_fallthru
          _
        // Predicated region
        $region33: #{tpu_custom_call.1} parent=11 // pred_check
          %p268 = pneg %p170
        $region34: #{tpu_custom_call.1} parent=11 // pred_check_branch
          %270 = sbr.rel (%p268) target = $region36
        $region35: #{tpu_custom_call.1} parent=11 // pred_region
          _
        $region36: #{tpu_custom_call.1} parent=11 // pred_fallthru
          _
        // Predicated region
        $region37: #{tpu_custom_call.1} parent=11 // pred_check
          %p271 = pneg %p191
        $region38: #{tpu_custom_call.1} parent=11 // pred_check_branch
          %273 = sbr.rel (%p271) target = $region40
        $region39: #{tpu_custom_call.1} parent=11 // pred_region
          _
        $region40: #{tpu_custom_call.1} parent=11 // pred_fallthru
          _
        // Predicated region
        $region41: #{tpu_custom_call.1} parent=11 // pred_check
          %p274 = pneg %p212
        $region42: #{tpu_custom_call.1} parent=11 // pred_check_branch
          %276 = sbr.rel (%p274) target = $region44
        $region43: #{tpu_custom_call.1} parent=11 // pred_region
          _
        $region44: #{tpu_custom_call.1} parent=11 // pred_fallthru
          _
      $region12: #{tpu_custom_call.1} parent=5 // pred_fallthru
        _
      %p277 = scmp.lt.s32.totalorder %s18, 2
      // Predicated region
      $region45: #{tpu_custom_call.1} parent=5 // pred_check
        %p278 = pneg %p277
      $region46: #{tpu_custom_call.1} parent=5 // pred_check_branch
        %280 = sbr.rel (%p278) target = $region48
      $region47: #{tpu_custom_call.1} parent=5 // pred_region
        // Predicated region
        $region49: #{tpu_custom_call.1} parent=47 // pred_check
          %p281 = pneg %p38
        $region50: #{tpu_custom_call.1} parent=47 // pred_check_branch
          %283 = sbr.rel (%p281) target = $region52
        $region51: #{tpu_custom_call.1} parent=47 // pred_region
          %p284 = scmp.lt.s32.totalorder %s18, 1
          %s285 = scalar_select %p284, %s18, 1
          %s286 = smul.addr %s285, 8
          %s287 = scalar_lea.vmem %s0, %s286
        $region52: #{tpu_custom_call.1} parent=47 // pred_fallthru
          _
      $region48: #{tpu_custom_call.1} parent=5 // pred_fallthru
        _
      %p288 = scmp.le.s32.totalorder 1, %s18
      %p289 = scmp.lt.s32.totalorder %s18, 3
      %p290 = pnand %p288, %p289
      %p291 = pneg %p290
      // Predicated region
      $region53: #{tpu_custom_call.1} parent=5 // pred_check
        _
      $region54: #{tpu_custom_call.1} parent=5 // pred_check_branch
        %293 = sbr.rel (%p290) target = $region56
      $region55: #{tpu_custom_call.1} parent=5 // pred_region
        %s294 = ssub.s32 %s18, 1
        %p295 = scmp.lt.s32.totalorder %s23, 1
        %s296 = scalar_select %p295, %s23, 1
        %s297 = smul.addr %s296, 8
        %s298 = scalar_lea.vmem %s0, %s297
        %p299 = pneg %p44
        %p300 = pneg %p41
        %p301 = pneg %p65
        %p302 = pneg %p62
        %p303 = pneg %p86
        %p304 = pneg %p83
        %p305 = pneg %p107
        %p306 = pneg %p104
        %p307 = pneg %p128
        %p308 = pneg %p125
        %p309 = pneg %p149
        %p310 = pneg %p146
        %p311 = pneg %p170
        %p312 = pneg %p167
        %p313 = pneg %p191
        %p314 = pneg %p188
        %p315 = pneg %p212
        %p316 = pneg %p209
        %p317 = pneg %p238
        %p318 = pneg %p235
        %s319 = sand.u32 %s225, 1
        %s320 = scalar_lea.sflag [#allocation4], %s319
        %s321 = sand.u32 %s225, 1
        %s322 = smul.addr %s321, 8
        %s323 = scalar_lea.vmem [#allocation3], %s322
        %p324 = scmp.lt.s32.totalorder %s23, 1
        %s325 = scalar_select %p324, %s23, 1
        %s326 = smul.addr %s325, 8
        %s327 = scalar_lea.vmem %s0, %s326
        %v329 = vld [vmem:[%s327] sm:$0xff]
        %v330 = vld [vmem:[%s1] sm:$0x1]
        %v331 = vmul.f32 %v329, %v329
        %vm332 = vcmask 261120
        %v333 = vsel %vm332, %v331, 0.0
        %334 = vadd.xlane.f32.xlu0 %v333
        %v335 = vpop.xlane.xlu0 %334
        %v336 = vrcp.pop 32.0
        %v337 = vmul.f32 32.0, %v336
        %v338 = vsub.f32 1.0, %v337
        %v339 = vmul.f32 %v336, %v338
        %v340 = vadd.f32 %v336, %v339
        %vm341 = vweird.f32 %v336
        %v342 = vsel %vm341, %v336, %v340
        %v343 = vmul.f32 %v335, %v342
        %v344 = vadd.f32 %v343, 1e-06
        %v345 = vrsqrt.pop %v344
        %v346 = vmul.f32 %v345, %v344
        %v347 = vmul.f32 %v346, %v345
        %v348 = vmul.f32 0.5, %v347
        %v349 = vsub.f32 1.5, %v348
        %v350 = vmul.f32 %v345, %v349
        %vm351 = vweird.f32 %v344
        %vm352 = vweird.f32 %v345
        %vm353 = vmor %vm351, %vm352
        %v354 = vsel %vm353, %v345, %v350
        %v355 = vmul.f32 %v329, %v354
        %v357 = vperm.slane %v330, 0
        %v359 = vmul.f32 %v355, %v357
        %v360 = vpack.c.bf16 %v359, %v359
        %v361 = vld [vmem:[%s2] sm:$0xf]
        %v362 = vld [vmem:[%s2 + $0x4] sm:$0xf]
        %v363 = vld [vmem:[%s2 + $0x8] sm:$0xf]
        %v364 = vld [vmem:[%s2 + $0xc] sm:$0xf]
        %v369 = vunpack.c.l.b16 %v361
        %v370 = vunpack.c.l.b16 %v362
        %v371 = vunpack.c.l.b16 %v363
        %v372 = vunpack.c.l.b16 %v364
        %v373 = vpack.c.b16 %v370, %v369
        %v374 = vpack.c.b16 %v372, %v371
        %v378 = vsel %vm332, %v360, 0
        %380 = vmatpush.bf16.msra.mxu0 0
        %381 = vmatpush.bf16.msra.mxu0 0
        %382 = vmatpush.bf16.msra.mxu0 0
        %383 = vmatpush.bf16.msra.mxu0 0
        %384 = vmatpush.bf16.msra.mxu0 0
        %385 = vmatpush.bf16.msra.mxu0 0
        %386 = vmatpush.bf16.msra.mxu0 %v374
        %387 = vmatpush.bf16.msra.mxu0 %v373
        %388 = vmatmul.bf16.gmra.mxu0 %v378
        %v389 = vpop.f32.mrf.mxu0
        %v390 = vadd.f32 0.0, %v389
        %v391 = vpop.f32.mrf.mxu0
        %392 = vdwg.mxu0
        %v393 = vpack.c.bf16 %v390, %v390
        %v395 = vunpack.c.l.b16 %v393
        %v396 = vpack.c.b16 %v395, %v395
        %397 = vrot.lane.b32.xlu0 %v396, 96
        %v398 = vpop.permute.xlu0 %397
        %v400 = vsel %vm332, %v393, 0
        %v403 = vsel %vm332, %v398, 0
        %405 = vmatpush.bf16.xpose.msra.mxu0 0
        %406 = vmatpush.bf16.xpose.msra.mxu0 0
        %407 = vmatpush.bf16.xpose.msra.mxu0 0
        %408 = vmatpush.bf16.xpose.msra.mxu0 0
        %409 = vmatpush.bf16.xpose.msra.mxu0 0
        %410 = vmatpush.bf16.xpose.msra.mxu0 0
        %411 = vmatpush.bf16.xpose.msra.mxu0 0
        %412 = vmatpush.bf16.xpose.msra.mxu0 %v403
        %413 = vmatmul.bf16.gmra.mxu0 %v400
        %v414 = vpop.f32.mrf.mxu0
        %v415 = vadd.f32 0.0, %v414
        %v416 = vpop.f32.mrf.mxu0
        %417 = vdwg.mxu0
        %vm418 = vcmask 64512
        %v419 = vsel %vm418, %v415, -inf
        %420 = vmax.xlane.f32.xlu0 %v419
        %v421 = vpop.xlane.xlu0 %420
        %v422 = vsub.f32 %v415, %v421
        %v423 = vmul.f32 %v422, 1.442695
        %v424 = vpow.pop %v423
        %v425 = vsel %vm418, %v424, 0.0
        %426 = vadd.xlane.f32.xlu0 %v425
        %v427 = vpop.xlane.xlu0 %426
        %v428 = vrcp.pop %v427
        %v429 = vmul.f32 %v424, %v428
        %v430 = vpack.c.bf16 %v429, %v429
        %431 = vrot.lane.b32.xlu0 %v396, 64
        %v432 = vpop.permute.xlu0 %431
        %v434 = vsel %vm418, %v430, 0
        %vm436 = vcmask 1043456
        %v438 = vsel %vm436, %v432, 0
        %440 = vmatpush.bf16.msra.mxu0 0
        %441 = vmatpush.bf16.msra.mxu0 0
        %442 = vmatpush.bf16.msra.mxu0 0
        %443 = vmatpush.bf16.msra.mxu0 0
        %444 = vmatpush.bf16.msra.mxu0 0
        %445 = vmatpush.bf16.msra.mxu0 0
        %446 = vmatpush.bf16.msra.mxu0 0
        %447 = vmatpush.bf16.msra.mxu0 %v438
        %448 = vmatmul.bf16.gmra.mxu0 %v434
        %v449 = vpop.f32.mrf.mxu0
        %v450 = vadd.f32 0.0, %v449
        %v451 = vpop.f32.mrf.mxu0
        %452 = vdwg.mxu0
        %v453 = vpack.c.bf16 %v450, %v450
        %v454 = vld [vmem:[%s3] sm:$0xf]
        %v455 = vld [vmem:[%s3 + $0x4] sm:$0xf]
        %v456 = vld [vmem:[%s3 + $0x8] sm:$0xf]
        %v457 = vld [vmem:[%s3 + $0xc] sm:$0xf]
        %v462 = vunpack.c.l.b16 %v454
        %v463 = vunpack.c.l.b16 %v455
        %v464 = vunpack.c.l.b16 %v456
        %v465 = vunpack.c.l.b16 %v457
        %v466 = vpack.c.b16 %v463, %v462
        %v467 = vpack.c.b16 %v465, %v464
        %v471 = vsel %vm332, %v453, 0
        %473 = vmatpush.bf16.msra.mxu0 0
        %474 = vmatpush.bf16.msra.mxu0 0
        %475 = vmatpush.bf16.msra.mxu0 0
        %476 = vmatpush.bf16.msra.mxu0 0
        %477 = vmatpush.bf16.msra.mxu0 0
        %478 = vmatpush.bf16.msra.mxu0 0
        %479 = vmatpush.bf16.msra.mxu0 %v467
        %480 = vmatpush.bf16.msra.mxu0 %v466
        %481 = vmatmul.bf16.gmra.mxu0 %v471
        %v482 = vpop.f32.mrf.mxu0
        %v483 = vadd.f32 0.0, %v482
        %v484 = vpop.f32.mrf.mxu0
        %485 = vdwg.mxu0
        %v486 = vadd.f32 %v329, %v483
        %487 = vst.msk [vmem:[#allocation2] sm:$0xff] %vm332, %v486
        %v488 = vld [vmem:[%s4] sm:$0x1]
        %v489 = vmul.f32 %v486, %v486
        %v490 = vsel %vm332, %v489, 0.0
        %491 = vadd.xlane.f32.xlu0 %v490
        %v492 = vpop.xlane.xlu0 %491
        %v493 = vmul.f32 %v492, %v342
        %v494 = vadd.f32 %v493, 1e-06
        %v495 = vrsqrt.pop %v494
        %v496 = vmul.f32 %v495, %v494
        %v497 = vmul.f32 %v496, %v495
        %v498 = vmul.f32 0.5, %v497
        %v499 = vsub.f32 1.5, %v498
        %v500 = vmul.f32 %v495, %v499
        %vm501 = vweird.f32 %v494
        %vm502 = vweird.f32 %v495
        %vm503 = vmor %vm501, %vm502
        %v504 = vsel %vm503, %v495, %v500
        %v505 = vmul.f32 %v486, %v504
        %v507 = vperm.slane %v488, 0
        %v509 = vmul.f32 %v505, %v507
        %v510 = vpack.c.bf16 %v509, %v509
        %v511 = vld [vmem:[%s5] sm:$0xf]
        %v512 = vld [vmem:[%s5 + $0x4] sm:$0xf]
        %v513 = vld [vmem:[%s5 + $0x8] sm:$0xf]
        %v514 = vld [vmem:[%s5 + $0xc] sm:$0xf]
        %v515 = vld [vmem:[%s6] sm:$0x1]
        %v517 = vperm.slane %v515, 0
        %v523 = vunpack.c.l.b16 %v511
        %v524 = vunpack.c.l.b16 %v512
        %v525 = vunpack.c.l.b16 %v513
        %v526 = vunpack.c.l.b16 %v514
        %v527 = vpack.c.b16 %v524, %v523
        %v528 = vpack.c.b16 %v526, %v525
        %v532 = vsel %vm332, %v510, 0
        %534 = vmatpush.bf16.msra.mxu0 0
        %535 = vmatpush.bf16.msra.mxu0 0
        %536 = vmatpush.bf16.msra.mxu0 0
        %537 = vmatpush.bf16.msra.mxu0 0
        %538 = vmatpush.bf16.msra.mxu0 0
        %539 = vmatpush.bf16.msra.mxu0 0
        %540 = vmatpush.bf16.msra.mxu0 %v528
        %541 = vmatpush.bf16.msra.mxu0 %v527
        %542 = vmatmul.bf16.gmra.mxu0 %v532
        %v543 = vpop.f32.mrf.mxu0
        %v544 = vadd.f32 %v517, %v543
        %v545 = vpop.f32.mrf.mxu0
        %546 = vdwg.mxu0
        %v547 = vmul.f32 %v544, 0.70710677
        %v548 = vand.u32 2147483647, %v547
        %v549 = vmul.f32 %v548, 0.3275911
        %v550 = vadd.f32 %v549, 1.0
        %v551 = vrcp.pop %v550
        %v552 = vmul.f32 %v551, 1.0614054
        %v553 = vadd.f32 %v552, -1.4531521
        %v554 = vmul.f32 %v553, %v551
        %v555 = vadd.f32 %v554, 1.4214138
        %v556 = vmul.f32 %v555, %v551
        %v557 = vadd.f32 %v556, -0.28449672
        %v558 = vmul.f32 %v557, %v551
        %v559 = vadd.f32 %v558, 0.2548296
        %v560 = vmul.f32 %v559, %v551
        %v561 = vsub.f32 0.0, %v548
        %v562 = vmul.f32 %v561, %v548
        %v563 = vmul.f32 %v562, 1.442695
        %v564 = vpow.pop %v563
        %v565 = vmul.f32 %v560, %v564
        %v566 = vsub.f32 1.0, %v565
        %vm567 = vcmp.ge.f32.partialorder %v547, 0.0
        %v568 = vsub.f32 0.0, %v566
        %v569 = vsel %vm567, %v566, %v568
        %v570 = vmul.f32 %v544, 0.5
        %v571 = vadd.f32 %v569, 1.0
        %v572 = vmul.f32 %v570, %v571
        %v573 = vpack.c.bf16 %v572, %v572
        %v574 = vld [vmem:[%s7] sm:$0xf]
        %v575 = vld [vmem:[%s7 + $0x4] sm:$0xf]
        %v576 = vld [vmem:[%s7 + $0x8] sm:$0xf]
        %v577 = vld [vmem:[%s7 + $0xc] sm:$0xf]
        %v578 = vld [vmem:[%s7 + $0x10] sm:$0xf]
        %v579 = vld [vmem:[%s7 + $0x14] sm:$0xf]
        %v580 = vld [vmem:[%s7 + $0x18] sm:$0xf]
        %v581 = vld [vmem:[%s7 + $0x1c] sm:$0xf]
        %v582 = vld [vmem:[%s7 + $0x20] sm:$0xf]
        %v583 = vld [vmem:[%s7 + $0x24] sm:$0xf]
        %v584 = vld [vmem:[%s7 + $0x28] sm:$0xf]
        %v585 = vld [vmem:[%s7 + $0x2c] sm:$0xf]
        %v586 = vld [vmem:[%s7 + $0x30] sm:$0xf]
        %v587 = vld [vmem:[%s7 + $0x34] sm:$0xf]
        %v588 = vld [vmem:[%s7 + $0x38] sm:$0xf]
        %v589 = vld [vmem:[%s7 + $0x3c] sm:$0xf]
        %v590 = vld [vmem:[%s8] sm:$0x1]
        %v592 = vperm.slane %v590, 0
        %v610 = vunpack.c.l.b16 %v574
        %v611 = vunpack.c.l.b16 %v575
        %v612 = vunpack.c.l.b16 %v576
        %v613 = vunpack.c.l.b16 %v577
        %v614 = vunpack.c.l.b16 %v578
        %v615 = vunpack.c.l.b16 %v579
        %v616 = vunpack.c.l.b16 %v580
        %v617 = vunpack.c.l.b16 %v581
        %v618 = vunpack.c.l.b16 %v582
        %v619 = vunpack.c.l.b16 %v583
        %v620 = vunpack.c.l.b16 %v584
        %v621 = vunpack.c.l.b16 %v585
        %v622 = vunpack.c.l.b16 %v586
        %v623 = vunpack.c.l.b16 %v587
        %v624 = vunpack.c.l.b16 %v588
        %v625 = vunpack.c.l.b16 %v589
        %v626 = vpack.c.b16 %v611, %v610
        %v627 = vpack.c.b16 %v613, %v612
        %v628 = vpack.c.b16 %v615, %v614
        %v629 = vpack.c.b16 %v617, %v616
        %v630 = vpack.c.b16 %v619, %v618
        %v631 = vpack.c.b16 %v621, %v620
        %v632 = vpack.c.b16 %v623, %v622
        %v633 = vpack.c.b16 %v625, %v624
        %642 = vmatpush.bf16.msra.mxu0 %v633
        %643 = vmatpush.bf16.msra.mxu0 %v632
        %644 = vmatpush.bf16.msra.mxu0 %v631
        %645 = vmatpush.bf16.msra.mxu0 %v630
        %646 = vmatpush.bf16.msra.mxu0 %v629
        %647 = vmatpush.bf16.msra.mxu0 %v628
        %648 = vmatpush.bf16.msra.mxu0 %v627
        %649 = vmatpush.bf16.msra.mxu0 %v626
        %650 = vmatmul.bf16.gmra.mxu0 %v573
        %v651 = vpop.f32.mrf.mxu0
        %v652 = vadd.f32 %v592, %v651
        %v653 = vpop.f32.mrf.mxu0
        %654 = vdwg.mxu0
        %v655 = vld [vmem:[#allocation2] sm:$0xff]
        %v656 = vadd.f32 %v655, %v652
        %657 = vst.msk [vmem:[%s323] sm:$0xff] %vm332, %v656
        %s658 = sand.u32 %s225, 1
        %s659 = scalar_lea.sflag [#allocation4], %s658
        %s660 = sand.u32 %s225, 1
        %s661 = smul.addr %s660, 8
        %s662 = scalar_lea.vmem [#allocation3], %s661
        // Predicated region
        $region57: #{tpu_custom_call.1} parent=55 // pred_check
          %p663 = pneg %p235
        $region58: #{tpu_custom_call.1} parent=55 // pred_check_branch
          %665 = sbr.rel (%p663) target = $region60
        $region59: #{tpu_custom_call.1} parent=55 // pred_region
          %667 = vsyncadd %s659, 0
          %s668 = smul.addr %s23, 8
          %s669 = scalar_lea.hbm %s9, %s668
          %s671 = sshll.u32 %s662, 4
          %s672 = int_to_ptr.vmem [resolvable:$true] %s671
          %s673 = sshll.u32 %s669, 4
          %s674 = int_to_ptr.hbm [resolvable:$true] %s673
          %676 = dma.vmem_to_hbm [thread:$0]  %s672, 128, %s674, %s659
        $region60: #{tpu_custom_call.1} parent=55 // pred_fallthru
          _
      $region56: #{tpu_custom_call.1} parent=5 // pred_fallthru
        _
      %p677 = scmp.le.s32.totalorder 2, %s18
      // Predicated region
      $region61: #{tpu_custom_call.1} parent=5 // pred_check
        %p678 = pneg %p677
      $region62: #{tpu_custom_call.1} parent=5 // pred_check_branch
        %680 = sbr.rel (%p678) target = $region64
      $region63: #{tpu_custom_call.1} parent=5 // pred_region
        %s681 = ssub.s32 %s18, 2
        // Predicated region
        $region65: #{tpu_custom_call.1} parent=63 // pred_check
          %p682 = pneg %p241
        $region66: #{tpu_custom_call.1} parent=63 // pred_check_branch
          %684 = sbr.rel (%p682) target = $region68
        $region67: #{tpu_custom_call.1} parent=63 // pred_region
          %s685 = sand.u32 %s226, 1
          %s686 = scalar_lea.sflag [#allocation4], %s685
          %s687 = sand.u32 %s226, 1
          %s688 = smul.addr %s687, 8
          %s689 = scalar_lea.vmem [#allocation3], %s688
          %691 = dma.done %s686, 128
        $region68: #{tpu_custom_call.1} parent=63 // pred_fallthru
          _
      $region64: #{tpu_custom_call.1} parent=5 // pred_fallthru
        _
    $region6: #{tpu_custom_call.1} parent=1 // loop_footer
      %s22 = sadd.s32 1, %s18
    $region7: #{tpu_custom_call.1} parent=1 // loop_footer_branch
      %17 = sbr.rel target = $region3
    $region8: #{tpu_custom_call.1} parent=1 // loop_exit
      _
    %692 = vsyncpa [#allocation4], 1
    %s693 = scalar_lea.sflag [#allocation4], 1
    %694 = vsyncpa %s693, 1

</llo_original>
